<compile_context>
chip_gen: v5e
topology: v5e:2x2
jax: 0.10.0
libtpu: 0.0.40
codegen_flags: <defaults>
</compile_context>

<pallas_src>
import functools
import math

import jax
import jax.numpy as jnp
from jax.experimental import pallas as pl
from jax.experimental.pallas import tpu as pltpu


_VMEM_LIMIT = 32 * 1024 * 1024  # explicit scoped-VMEM budget; leaves headroom on v7x (64 MiB)


# ---------------------------------------------------------------------------
# Pallas kernel 1: LayerNorm over (C, H, W) per batch element (no affine).
# ---------------------------------------------------------------------------
def _ln_chw_kernel(x_ref, o_ref, *, eps, inv_n):
    x = x_ref[0].astype(jnp.float32)                           # (R, 128), lane dense
    # Single-pass statistics: var = E[x^2] - mu^2 (one sweep over the block).
    # Zero-padded tail elements contribute 0 to both sums; inv_n = 1/true_count.
    s1 = jnp.sum(jnp.sum(x, axis=1, keepdims=True), axis=0, keepdims=True)
    s2 = jnp.sum(jnp.sum(x * x, axis=1, keepdims=True), axis=0, keepdims=True)
    mu = s1 * inv_n
    var = s2 * inv_n - mu * mu
    o_ref[0] = ((x - mu) * jax.lax.rsqrt(var + eps)).astype(o_ref.dtype)


def layernorm_chw_pallas(x, eps=1e-5):
    """x: (N, C, H, W) -> normalized over (C, H, W) per batch element."""
    N, C, H, W = x.shape
    total = C * H * W
    total_p = ((total + 127) // 128) * 128          # lane-dense flattened view
    R = total_p // 128

    x2 = x.reshape(N, total)
    if total_p != total:
        x2 = jnp.pad(x2, ((0, 0), (0, total_p - total)))   # zero tail (masked via inv_n)
    x2 = x2.reshape(N, R, 128)

    # TODO(synk): for very large (C,H,W) slabs (v7x: 64 MiB VMEM), tile the flattened
    # axis with a two-pass grid=(N, chunks) reduction instead of one whole-slab block.
    out = pl.pallas_call(
        functools.partial(_ln_chw_kernel, eps=float(eps), inv_n=1.0 / float(total)),
        out_shape=jax.ShapeDtypeStruct((N, R, 128), x.dtype),
        grid_spec=pltpu.PrefetchScalarGridSpec(
            num_scalar_prefetch=0,
            grid=(N,),
            in_specs=[pl.BlockSpec((1, R, 128), lambda i: (i, 0, 0))],
            out_specs=pl.BlockSpec((1, R, 128), lambda i: (i, 0, 0)),
        ),
        compiler_params=pltpu.CompilerParams(
            dimension_semantics=("parallel",),
            vmem_limit_bytes=_VMEM_LIMIT,
        ),
    )(x2)
    out = out.reshape(N, total_p)
    if total_p != total:
        out = out[:, :total]
    return out.reshape(N, C, H, W)


def layernorm_chw_ref(x, eps=1e-5):
    mu = jnp.mean(x, axis=(1, 2, 3), keepdims=True)
    var = jnp.mean((x - mu) ** 2, axis=(1, 2, 3), keepdims=True)
    return (x - mu) / jnp.sqrt(var + eps)


# ---------------------------------------------------------------------------
# Pallas kernel 2: the attention core, channels-major (C on sublanes, tokens on lanes).
# ---------------------------------------------------------------------------
def _grid_attn_kernel(x_ref, wqk_t_ref, o_ref, *, inv_scale, pad_correction):
    """For each pixel-unshuffled group g in the block (x holds X^T, shape (C, L)):

        qk = Wqk^T @ X^T ; qk /= (||qk|| + 1e-8)                  (per token)
        S  = (qk^T qk + 1) / sqrt(embed)     -- "+1"/scale folded into the matmul
        P  = exp(S)                          -- no max-subtract: qk is unit-norm so
                                                S is in [0, 2*inv_scale]; exp is safe
        out^T = (X^T @ P) / colsum(P)        -- P is symmetric, so X^T @ P == X^T @ P^T
                                                and its column sums are the softmax
                                                denominators; both come from one plain
                                                (C+1, L) @ (L, L) matmul.

    Zero-padded token lanes have qk == 0 exactly, so each adds exactly exp(inv_scale)
    to every denominator (removed via `pad_correction`) and 0 to the PV rows.
    NOTE: dropping the max-subtraction is only valid while qk stays L2-normalized.
    """
    gb, c, lp = x_ref.shape
    wqk_t = wqk_t_ref[...].astype(jnp.float32)                  # (C, C) == Wqk^T
    ones_row = jnp.ones((1, lp), jnp.float32)                   # hoisted out of the loop

    # The contraction dim C (= embed//16) is tiny, so the MXU processes the per-group
    # dots independently whether they are written batched or unrolled; unrolling keeps
    # every dot in plain 2-D k-major forms and never transposes an (L, L) operand.
    # NOTE: operands stay f32 -- at these shapes the MXU is idle-dominated, so bf16
    # casts would only add rounding for no win.
    for g in range(gb):
        x = x_ref[g].astype(jnp.float32)                        # (C, L) == X^T

        # qk^T = Wqk^T @ X^T  (tokens stay on the 128-lane axis).
        qk = jax.lax.dot_general(wqk_t, x, (((1,), (0,)), ((), ())),
                                 preferred_element_type=jnp.float32)     # (C, L)

        # L2-normalize each token (same epsilon placement as the reference); the
        # divide becomes a multiply by an EUP approximate reciprocal.
        sumsq = jnp.sum(qk * qk, axis=0, keepdims=True)                  # (1, L)
        qk = qk * pl.reciprocal(jnp.sqrt(sumsq) + 1e-8, approx=True)

        # Scores with "+1" and 1/sqrt(embed) folded in via one constant channel.
        qk_ext = jnp.concatenate([qk, ones_row], axis=0)                 # (C+1, L)
        s = jax.lax.dot_general(qk_ext * inv_scale, qk_ext,
                                (((0,), (0,)), ((), ())),
                                preferred_element_type=jnp.float32)      # (L, L)
        p = jnp.exp(s)                                                   # unnormalized, symmetric

        # PV product and softmax denominators out of a single plain matmul.
        x_ext = jnp.concatenate([x, ones_row], axis=0)                   # (C+1, L)
        out_ext = jax.lax.dot_general(x_ext, p, (((1,), (0,)), ((), ())),
                                      preferred_element_type=jnp.float32)  # (C+1, L)
        denom = out_ext[c:c + 1, :] - pad_correction                     # (1, L)
        o_ref[g] = (out_ext[:c, :] *
                    pl.reciprocal(denom, approx=True)).astype(o_ref.dtype)


def _pick_group_block(num_groups, lp, max_bytes=8 * 1024 * 1024):
    """Groups per grid step: as many as fit an (L,L)-scores budget, but keep at least
    two grid steps when possible so the 'parallel' axis can feed both v7x cores."""
    cap = max(1, max_bytes // (lp * lp * 4))
    divisors = [d for d in range(1, num_groups + 1) if num_groups % d == 0]
    fitting = [d for d in divisors if d <= cap] or [1]
    gb = fitting[-1]
    if gb == num_groups and num_groups >= 2:
        smaller = [d for d in fitting if d <= num_groups // 2]
        if smaller:
            gb = smaller[-1]
    return gb


def attention_core_pallas(xx, wqk, scale_e):
    """xx: (B, C, sh, sw) channels-major group features; returns the same shape."""
    B, C, sh, sw = xx.shape
    L = sh * sw
    Lp = ((L + 127) // 128) * 128                  # lane-dense token axis
    n_pad = Lp - L

    x = xx.reshape(B, C, L)                        # pure reshape, no transpose
    if n_pad:
        x = jnp.pad(x, ((0, 0), (0, 0), (0, n_pad)))

    inv_scale = 1.0 / math.sqrt(float(scale_e))
    # Every zero-padded key token scores exactly inv_scale against any query, so its
    # contribution to each softmax denominator is exactly exp(inv_scale).
    pad_correction = float(n_pad) * math.exp(inv_scale)

    gb = _pick_group_block(B, Lp)
    wqk_t = jnp.transpose(wqk)                     # (C, C): makes the qk dot a plain (m,k)x(k,n)

    # TODO(synk): for large L, tile the query axis with an online softmax (flash style)
    # so the f32 (L, L) scores block stays inside v7x's 64 MiB VMEM.
    out = pl.pallas_call(
        functools.partial(_grid_attn_kernel, inv_scale=inv_scale,
                          pad_correction=pad_correction),
        out_shape=jax.ShapeDtypeStruct((B, C, Lp), xx.dtype),
        grid_spec=pltpu.PrefetchScalarGridSpec(
            num_scalar_prefetch=0,
            grid=(B // gb,),
            in_specs=[
                pl.BlockSpec((gb, C, Lp), lambda i: (i, 0, 0)),   # batch of groups
                pl.BlockSpec((C, C), lambda i: (0, 0)),           # Wqk^T (replicated)
            ],
            out_specs=pl.BlockSpec((gb, C, Lp), lambda i: (i, 0, 0)),
        ),
        compiler_params=pltpu.CompilerParams(
            dimension_semantics=("parallel",),
            vmem_limit_bytes=_VMEM_LIMIT,
        ),
    )(x, wqk_t)

    if n_pad:
        out = out[:, :, :L]
    return out.reshape(B, C, sh, sw)


def attention_core_ref(xx, wqk, scale_e):
    """Pure-JAX reference matching the PyTorch math exactly."""
    B, C, sh, sw = xx.shape
    L = sh * sw
    hp = jax.lax.Precision.HIGHEST
    x = jnp.transpose(xx, (0, 2, 3, 1)).reshape(B, L, C)
    qk = jnp.einsum('blc,ck->blk', x, wqk, precision=hp)
    qk = qk / (jnp.linalg.norm(qk, axis=-1, keepdims=True) + 1e-8)
    attn = jnp.einsum('blc,bmc->blm', qk, qk, precision=hp)
    attn = (attn + 1.0) / math.sqrt(float(scale_e))
    attn = jax.nn.softmax(attn, axis=-1)
    out = jnp.einsum('blm,bmc->blc', attn, x, precision=hp)
    return jnp.transpose(out.reshape(B, sh, sw, C), (0, 3, 1, 2))


# ---------------------------------------------------------------------------
# Plain-JAX pieces: 1x1 convs, ShiftConv2d, pixel (un)shuffle.
# ---------------------------------------------------------------------------
def conv1x1(x, w, b):
    # w: (Cout, Cin, 1, 1), b: (Cout,)
    y = jnp.einsum('nchw,oc->nohw', x, w[:, :, 0, 0])
    return y + b[None, :, None, None]


def shift_conv3x3(x, w, b, s):
    # ShiftConv2d(k=3, stride=1, padding=s, dilation=s):
    # pad top by k, same-size dilated conv, crop bottom k.
    k = 3 // 2 + (s // 2) * 2
    if k > 0:
        x = jnp.pad(x, ((0, 0), (0, 0), (k, 0), (0, 0)))
    y = jax.lax.conv_general_dilated(
        x, w, window_strides=(1, 1), padding=((s, s), (s, s)),
        rhs_dilation=(s, s), dimension_numbers=('NCHW', 'OIHW', 'NCHW'))
    y = y + b[None, :, None, None]
    if k > 0:
        y = y[:, :, :-k, :]
    return y


def pixel_unshuffle(x, f):
    b, c, h, w = x.shape
    x = x.reshape(b, c, h // f, f, w // f, f)
    x = jnp.transpose(x, (0, 1, 3, 5, 2, 4))
    return x.reshape(b, c * f * f, h // f, w // f)


def pixel_shuffle(x, f):
    b, c, h, w = x.shape
    x = x.reshape(b, f, f, c // (f * f), h, w)
    x = jnp.transpose(x, (0, 3, 4, 1, 5, 2))
    return x.reshape(b, c // (f * f), h * f, w * f)


# ---------------------------------------------------------------------------
# GridAttention forward.
# ---------------------------------------------------------------------------
def make_forward(embed_size, f_scale, stride, is_shift=True, use_pallas=True):
    scale_e = embed_size // f_scale   # "self.embed_size" in the PyTorch module
    f = f_scale * stride

    def get_attention(x, wqk):
        n, c, h, w = x.shape
        k = h // 2 if is_shift else 0
        if is_shift and k > 0:
            x = jnp.pad(x, ((0, 0), (0, 0), (k, 0), (0, 0)))   # Shift2d.pad (top)
        xx = layernorm_chw_pallas(x) if use_pallas else layernorm_chw_ref(x)
        _, _, hh, ww = xx.shape
        ph, pw = (-hh) % f, (-ww) % f
        if ph or pw:
            xx = jnp.pad(xx, ((0, 0), (0, 0), (0, ph), (0, pw)))
        xx = pixel_unshuffle(xx, f)
        f2 = f * f
        _, _, sh, sw = xx.shape
        xx = xx.reshape(n, f2, c, sh, sw).reshape(n * f2, c, sh, sw)

        core = attention_core_pallas if use_pallas else attention_core_ref
        out = core(xx, wqk, scale_e)

        out = out.reshape(n, f2, c, sh, sw).reshape(n, f2 * c, sh, sw)
        out = pixel_shuffle(out, f)
        if ph:
            out = out[:, :, :-ph, :]
        if pw:
            out = out[:, :, :, :-pw]
        if is_shift and k > 0:
            out = out[:, :, :out.shape[2] - k, :]               # Shift2d.crop (bottom)
        return out

    def get_ff(x, p):
        h = jax.nn.relu(conv1x1(x, p['ff1_w'], p['ff1_b']))
        h = jax.nn.relu(shift_conv3x3(h, p['ff2_w'], p['ff2_b'], stride))
        return conv1x1(h, p['ff3_w'], p['ff3_b'])

    def forward(x, p):
        a = conv1x1(x, p['c1a_w'], p['c1a_b'])
        a = conv1x1(a, p['c1b_w'], p['c1b_b'])
        att = get_attention(a, p['wqk'])
        y = conv1x1(att, p['c2_w'], p['c2_b'])
        y = conv1x1(y, p['cv_w'], p['cv_b'])
        z = x + y
        return x + get_ff(z, p)

    return forward


def init_params(key, embed_size):
    scale = 4 ** 2
    c_att = embed_size // scale
    e4 = embed_size // 4
    ks = jax.random.split(key, 8)

    def w(k, co, ci, kh=1, kw=1):
        return jax.random.normal(k, (co, ci, kh, kw), jnp.float32) / math.sqrt(ci * kh * kw)

    def z(co):
        return jnp.zeros((co,), jnp.float32)

    return dict(
        c1a_w=w(ks[0], c_att, embed_size), c1a_b=z(c_att),
        c1b_w=w(ks[1], c_att, c_att),      c1b_b=z(c_att),
        c2_w=w(ks[2], embed_size, c_att),  c2_b=z(embed_size),
        cv_w=w(ks[3], embed_size, embed_size), cv_b=z(embed_size),
        wqk=jax.random.normal(ks[4], (c_att, c_att), jnp.float32),
        ff1_w=w(ks[5], e4, embed_size),    ff1_b=z(e4),
        ff2_w=w(ks[6], e4, e4, 3, 3),      ff2_b=z(e4),
        ff3_w=w(ks[7], embed_size, e4),    ff3_b=z(embed_size),
    )


if __name__ == "__main__":
    key = jax.random.PRNGKey(0)
    embed_size, f_scale, stride = 32, 2, 1
    N, H, W = 2, 16, 16

    kx, kp = jax.random.split(key)
    x = jax.random.normal(kx, (N, embed_size, H, W), dtype=jnp.float32)
    params = init_params(kp, embed_size)

    fwd = jax.jit(make_forward(embed_size, f_scale, stride,
                               is_shift=True, use_pallas=True))
    out = jax.block_until_ready(fwd(x, params))

    ref_fwd = jax.jit(make_forward(embed_size, f_scale, stride,
                                   is_shift=True, use_pallas=False))
    ref = jax.block_until_ready(ref_fwd(x, params))

    assert out.shape == (N, embed_size, H, W)
    assert bool(jnp.all(jnp.isfinite(out)))
    # Tolerance leaves a little room for the EUP approximate reciprocals
    # (qk-norm and softmax denominator) and the single-pass LayerNorm variance.
    assert jnp.allclose(out, ref, atol=3e-3, rtol=3e-3), \
        f"mismatch vs reference, max abs diff = {float(jnp.max(jnp.abs(out - ref)))}"

    print("KERNEL_OK")
</pallas_src>

<mosaic_0001>
module attributes {stable_mosaic.version = 11 : i64} {
  func.func @_ln_chw_kernel(%arg0: i32, %arg1: memref<1x6x128xf32, #tpu.memory_space<vmem>>, %arg2: memref<1x6x128xf32, #tpu.memory_space<vmem>>) attributes {dimension_semantics = [#tpu.dimension_semantics<parallel>], iteration_bounds = array<i64: 2>, scalar_prefetch = 0 : i64, scratch_operands = 0 : i64, tpu.core_type = #tpu.core_type<tc>, window_params = [{transform_indices = @transform_0, window_bounds = array<i64: 1, 6, 128>}, {transform_indices = @transform_1, window_bounds = array<i64: 1, 6, 128>}]} {
    %c0 = arith.constant 0 : index
    %c0_0 = arith.constant 0 : index
    %c0_1 = arith.constant 0 : index
    %0 = vector.load %arg1[%c0, %c0_0, %c0_1] : memref<1x6x128xf32, #tpu.memory_space<vmem>>, vector<1x6x128xf32>
    %1 = vector.shape_cast %0 : vector<1x6x128xf32> to vector<6x128xf32>
    %cst = arith.constant dense<0.000000e+00> : vector<6xf32>
    %2 = vector.multi_reduction <add>, %1, %cst [1] : vector<6x128xf32> to vector<6xf32>
    %3 = vector.shape_cast %2 : vector<6xf32> to vector<6x1xf32>
    %cst_2 = arith.constant dense<0.000000e+00> : vector<1xf32>
    %4 = vector.multi_reduction <add>, %3, %cst_2 [0] : vector<6x1xf32> to vector<1xf32>
    %5 = vector.shape_cast %4 : vector<1xf32> to vector<1x1xf32>
    %6 = arith.mulf %1, %1 : vector<6x128xf32>
    %cst_3 = arith.constant dense<0.000000e+00> : vector<6xf32>
    %7 = vector.multi_reduction <add>, %6, %cst_3 [1] : vector<6x128xf32> to vector<6xf32>
    %8 = vector.shape_cast %7 : vector<6xf32> to vector<6x1xf32>
    %cst_4 = arith.constant dense<0.000000e+00> : vector<1xf32>
    %9 = vector.multi_reduction <add>, %8, %cst_4 [0] : vector<6x1xf32> to vector<1xf32>
    %10 = vector.shape_cast %9 : vector<1xf32> to vector<1x1xf32>
    %cst_5 = arith.constant 0.00130208337 : f32
    %11 = vector.broadcast %cst_5 : f32 to vector<1x1xf32>
    %12 = arith.mulf %5, %11 : vector<1x1xf32>
    %cst_6 = arith.constant 0.00130208337 : f32
    %13 = vector.broadcast %cst_6 : f32 to vector<1x1xf32>
    %14 = arith.mulf %10, %13 : vector<1x1xf32>
    %15 = arith.mulf %12, %12 : vector<1x1xf32>
    %16 = arith.subf %14, %15 : vector<1x1xf32>
    %17 = vector.broadcast %12 : vector<1x1xf32> to vector<6x128xf32>
    %18 = arith.subf %1, %17 : vector<6x128xf32>
    %cst_7 = arith.constant 9.99999974E-6 : f32
    %19 = vector.broadcast %cst_7 : f32 to vector<1x1xf32>
    %20 = arith.addf %16, %19 : vector<1x1xf32>
    %21 = math.rsqrt %20 : vector<1x1xf32>
    %22 = vector.broadcast %21 : vector<1x1xf32> to vector<6x128xf32>
    %23 = arith.mulf %18, %22 : vector<6x128xf32>
    %c0_8 = arith.constant 0 : index
    %c0_9 = arith.constant 0 : index
    %c0_10 = arith.constant 0 : index
    %24 = vector.load %arg2[%c0_8, %c0_9, %c0_10] : memref<1x6x128xf32, #tpu.memory_space<vmem>>, vector<1x6x128xf32>
    %25 = vector.shape_cast %24 : vector<1x6x128xf32> to vector<6x128xf32>
    %26 = vector.shape_cast %23 : vector<6x128xf32> to vector<1x6x128xf32>
    tpu.vector_store %arg2[%c0_8, %c0_9, %c0_10], %26 {strides = array<i32>} : memref<1x6x128xf32, #tpu.memory_space<vmem>>, vector<1x6x128xf32>,
    return
  }
  func.func @transform_0(%arg0: i32) -> (i32, i32, i32) {
    %c0_i32 = arith.constant 0 : i32
    %c0_i32_0 = arith.constant 0 : i32
    %c0_i32_1 = arith.constant 0 : i32
    return %arg0, %c0_i32, %c0_i32_0 : i32, i32, i32
  }
  func.func @transform_1(%arg0: i32) -> (i32, i32, i32) {
    %c0_i32 = arith.constant 0 : i32
    %c0_i32_0 = arith.constant 0 : i32
    %c0_i32_1 = arith.constant 0 : i32
    return %arg0, %c0_i32, %c0_i32_0 : i32, i32, i32
  }
}

module attributes {stable_mosaic.version = 11 : i64} {
  func.func @_grid_attn_kernel(%arg0: i32, %arg1: memref<4x2x128xf32, #tpu.memory_space<vmem>>, %arg2: memref<2x2xf32, #tpu.memory_space<vmem>>, %arg3: memref<4x2x128xf32, #tpu.memory_space<vmem>>) attributes {dimension_semantics = [#tpu.dimension_semantics<parallel>], iteration_bounds = array<i64: 2>, scalar_prefetch = 0 : i64, scratch_operands = 0 : i64, tpu.core_type = #tpu.core_type<tc>, window_params = [{transform_indices = @transform_0, window_bounds = array<i64: 4, 2, 128>}, {pipeline_mode = #tpu.pipeline_mode<synchronous>, transform_indices = @transform_1, window_bounds = array<i64: 2, 2>}, {transform_indices = @transform_2, window_bounds = array<i64: 4, 2, 128>}]} {
    %c0 = arith.constant 0 : index
    %c0_0 = arith.constant 0 : index
    %0 = vector.load %arg2[%c0, %c0_0] : memref<2x2xf32, #tpu.memory_space<vmem>>, vector<2x2xf32>
    %cst = arith.constant 1.000000e+00 : f32
    %1 = vector.broadcast %cst : f32 to vector<1x128xf32>
    %c0_1 = arith.constant 0 : index
    %c0_2 = arith.constant 0 : index
    %c0_3 = arith.constant 0 : index
    %2 = vector.load %arg1[%c0_1, %c0_2, %c0_3] : memref<4x2x128xf32, #tpu.memory_space<vmem>>, vector<1x2x128xf32>
    %3 = vector.shape_cast %2 : vector<1x2x128xf32> to vector<2x128xf32>
    %cst_4 = arith.constant dense<0.000000e+00> : vector<2x128xf32>
    %4 = tpu.matmul %0, %3, %cst_4 {dimension_numbers = #tpu.dot_dimension_numbers<[1], [0], [0], [1], [0, 0, 1, 1], [], []>} : vector<2x2xf32>, vector<2x128xf32>, vector<2x128xf32> -> vector<2x128xf32>
    %5 = arith.mulf %4, %4 : vector<2x128xf32>
    %cst_5 = arith.constant dense<0.000000e+00> : vector<128xf32>
    %6 = vector.multi_reduction <add>, %5, %cst_5 [0] : vector<2x128xf32> to vector<128xf32>
    %7 = vector.shape_cast %6 : vector<128xf32> to vector<1x128xf32>
    %8 = math.sqrt %7 : vector<1x128xf32>
    %cst_6 = arith.constant 9.99999993E-9 : f32
    %9 = vector.broadcast %cst_6 : f32 to vector<1x128xf32>
    %10 = arith.addf %8, %9 : vector<1x128xf32>
    %11 = tpu.reciprocal %10 {approx = true} : vector<1x128xf32> -> vector<1x128xf32>
    %12 = vector.broadcast %11 : vector<1x128xf32> to vector<2x128xf32>
    %13 = arith.mulf %4, %12 : vector<2x128xf32>
    %14 = tpu.concatenate %13, %1 in 0 : vector<2x128xf32>, vector<1x128xf32> -> vector<3x128xf32>
    %cst_7 = arith.constant 2.500000e-01 : f32
    %15 = vector.broadcast %cst_7 : f32 to vector<3x128xf32>
    %16 = arith.mulf %14, %15 : vector<3x128xf32>
    %cst_8 = arith.constant dense<0.000000e+00> : vector<128x128xf32>
    %17 = tpu.matmul %16, %14, %cst_8 {dimension_numbers = #tpu.dot_dimension_numbers<[0], [0], [1], [1], [0, 1, 1, 1], [], []>} : vector<3x128xf32>, vector<3x128xf32>, vector<128x128xf32> -> vector<128x128xf32>
    %18 = math.exp %17 : vector<128x128xf32>
    %19 = tpu.concatenate %3, %1 in 0 : vector<2x128xf32>, vector<1x128xf32> -> vector<3x128xf32>
    %cst_9 = arith.constant dense<0.000000e+00> : vector<3x128xf32>
    %20 = tpu.matmul %19, %18, %cst_9 {dimension_numbers = #tpu.dot_dimension_numbers<[1], [0], [0], [1], [0, 0, 1, 1], [], []>} : vector<3x128xf32>, vector<128x128xf32>, vector<3x128xf32> -> vector<3x128xf32>
    %21 = vector.extract_strided_slice %20 {offsets = [2, 0], sizes = [1, 128], strides = [1, 1]} : vector<3x128xf32> to vector<1x128xf32>
    %cst_10 = arith.constant 41.0888138 : f32
    %22 = vector.broadcast %cst_10 : f32 to vector<1x128xf32>
    %23 = arith.subf %21, %22 : vector<1x128xf32>
    %24 = vector.extract_strided_slice %20 {offsets = [0, 0], sizes = [2, 128], strides = [1, 1]} : vector<3x128xf32> to vector<2x128xf32>
    %25 = tpu.reciprocal %23 {approx = true} : vector<1x128xf32> -> vector<1x128xf32>
    %26 = vector.broadcast %25 : vector<1x128xf32> to vector<2x128xf32>
    %27 = arith.mulf %24, %26 : vector<2x128xf32>
    %c0_11 = arith.constant 0 : index
    %c0_12 = arith.constant 0 : index
    %c0_13 = arith.constant 0 : index
    %28 = vector.load %arg3[%c0_11, %c0_12, %c0_13] : memref<4x2x128xf32, #tpu.memory_space<vmem>>, vector<1x2x128xf32>
    %29 = vector.shape_cast %28 : vector<1x2x128xf32> to vector<2x128xf32>
    %30 = vector.shape_cast %27 : vector<2x128xf32> to vector<1x2x128xf32>
    tpu.vector_store %arg3[%c0_11, %c0_12, %c0_13], %30 {strides = array<i32>} : memref<4x2x128xf32, #tpu.memory_space<vmem>>, vector<1x2x128xf32>,
    %c1 = arith.constant 1 : index
    %c0_14 = arith.constant 0 : index
    %c0_15 = arith.constant 0 : index
    %31 = vector.load %arg1[%c1, %c0_14, %c0_15] : memref<4x2x128xf32, #tpu.memory_space<vmem>>, vector<1x2x128xf32>
    %32 = vector.shape_cast %31 : vector<1x2x128xf32> to vector<2x128xf32>
    %cst_16 = arith.constant dense<0.000000e+00> : vector<2x128xf32>
    %33 = tpu.matmul %0, %32, %cst_16 {dimension_numbers = #tpu.dot_dimension_numbers<[1], [0], [0], [1], [0, 0, 1, 1], [], []>} : vector<2x2xf32>, vector<2x128xf32>, vector<2x128xf32> -> vector<2x128xf32>
    %34 = arith.mulf %33, %33 : vector<2x128xf32>
    %cst_17 = arith.constant dense<0.000000e+00> : vector<128xf32>
    %35 = vector.multi_reduction <add>, %34, %cst_17 [0] : vector<2x128xf32> to vector<128xf32>
    %36 = vector.shape_cast %35 : vector<128xf32> to vector<1x128xf32>
    %37 = math.sqrt %36 : vector<1x128xf32>
    %cst_18 = arith.constant 9.99999993E-9 : f32
    %38 = vector.broadcast %cst_18 : f32 to vector<1x128xf32>
    %39 = arith.addf %37, %38 : vector<1x128xf32>
    %40 = tpu.reciprocal %39 {approx = true} : vector<1x128xf32> -> vector<1x128xf32>
    %41 = vector.broadcast %40 : vector<1x128xf32> to vector<2x128xf32>
    %42 = arith.mulf %33, %41 : vector<2x128xf32>
    %43 = tpu.concatenate %42, %1 in 0 : vector<2x128xf32>, vector<1x128xf32> -> vector<3x128xf32>
    %cst_19 = arith.constant 2.500000e-01 : f32
    %44 = vector.broadcast %cst_19 : f32 to vector<3x128xf32>
    %45 = arith.mulf %43, %44 : vector<3x128xf32>
    %cst_20 = arith.constant dense<0.000000e+00> : vector<128x128xf32>
    %46 = tpu.matmul %45, %43, %cst_20 {dimension_numbers = #tpu.dot_dimension_numbers<[0], [0], [1], [1], [0, 1, 1, 1], [], []>} : vector<3x128xf32>, vector<3x128xf32>, vector<128x128xf32> -> vector<128x128xf32>
    %47 = math.exp %46 : vector<128x128xf32>
    %48 = tpu.concatenate %32, %1 in 0 : vector<2x128xf32>, vector<1x128xf32> -> vector<3x128xf32>
    %cst_21 = arith.constant dense<0.000000e+00> : vector<3x128xf32>
    %49 = tpu.matmul %48, %47, %cst_21 {dimension_numbers = #tpu.dot_dimension_numbers<[1], [0], [0], [1], [0, 0, 1, 1], [], []>} : vector<3x128xf32>, vector<128x128xf32>, vector<3x128xf32> -> vector<3x128xf32>
    %50 = vector.extract_strided_slice %49 {offsets = [2, 0], sizes = [1, 128], strides = [1, 1]} : vector<3x128xf32> to vector<1x128xf32>
    %cst_22 = arith.constant 41.0888138 : f32
    %51 = vector.broadcast %cst_22 : f32 to vector<1x128xf32>
    %52 = arith.subf %50, %51 : vector<1x128xf32>
    %53 = vector.extract_strided_slice %49 {offsets = [0, 0], sizes = [2, 128], strides = [1, 1]} : vector<3x128xf32> to vector<2x128xf32>
    %54 = tpu.reciprocal %52 {approx = true} : vector<1x128xf32> -> vector<1x128xf32>
    %55 = vector.broadcast %54 : vector<1x128xf32> to vector<2x128xf32>
    %56 = arith.mulf %53, %55 : vector<2x128xf32>
    %c1_23 = arith.constant 1 : index
    %c0_24 = arith.constant 0 : index
    %c0_25 = arith.constant 0 : index
    %57 = vector.load %arg3[%c1_23, %c0_24, %c0_25] : memref<4x2x128xf32, #tpu.memory_space<vmem>>, vector<1x2x128xf32>
    %58 = vector.shape_cast %57 : vector<1x2x128xf32> to vector<2x128xf32>
    %59 = vector.shape_cast %56 : vector<2x128xf32> to vector<1x2x128xf32>
    tpu.vector_store %arg3[%c1_23, %c0_24, %c0_25], %59 {strides = array<i32>} : memref<4x2x128xf32, #tpu.memory_space<vmem>>, vector<1x2x128xf32>,
    %c2 = arith.constant 2 : index
    %c0_26 = arith.constant 0 : index
    %c0_27 = arith.constant 0 : index
    %60 = vector.load %arg1[%c2, %c0_26, %c0_27] : memref<4x2x128xf32, #tpu.memory_space<vmem>>, vector<1x2x128xf32>
    %61 = vector.shape_cast %60 : vector<1x2x128xf32> to vector<2x128xf32>
    %cst_28 = arith.constant dense<0.000000e+00> : vector<2x128xf32>
    %62 = tpu.matmul %0, %61, %cst_28 {dimension_numbers = #tpu.dot_dimension_numbers<[1], [0], [0], [1], [0, 0, 1, 1], [], []>} : vector<2x2xf32>, vector<2x128xf32>, vector<2x128xf32> -> vector<2x128xf32>
    %63 = arith.mulf %62, %62 : vector<2x128xf32>
    %cst_29 = arith.constant dense<0.000000e+00> : vector<128xf32>
    %64 = vector.multi_reduction <add>, %63, %cst_29 [0] : vector<2x128xf32> to vector<128xf32>
    %65 = vector.shape_cast %64 : vector<128xf32> to vector<1x128xf32>
    %66 = math.sqrt %65 : vector<1x128xf32>
    %cst_30 = arith.constant 9.99999993E-9 : f32
    %67 = vector.broadcast %cst_30 : f32 to vector<1x128xf32>
    %68 = arith.addf %66, %67 : vector<1x128xf32>
    %69 = tpu.reciprocal %68 {approx = true} : vector<1x128xf32> -> vector<1x128xf32>
    %70 = vector.broadcast %69 : vector<1x128xf32> to vector<2x128xf32>
    %71 = arith.mulf %62, %70 : vector<2x128xf32>
    %72 = tpu.concatenate %71, %1 in 0 : vector<2x128xf32>, vector<1x128xf32> -> vector<3x128xf32>
    %cst_31 = arith.constant 2.500000e-01 : f32
    %73 = vector.broadcast %cst_31 : f32 to vector<3x128xf32>
    %74 = arith.mulf %72, %73 : vector<3x128xf32>
    %cst_32 = arith.constant dense<0.000000e+00> : vector<128x128xf32>
    %75 = tpu.matmul %74, %72, %cst_32 {dimension_numbers = #tpu.dot_dimension_numbers<[0], [0], [1], [1], [0, 1, 1, 1], [], []>} : vector<3x128xf32>, vector<3x128xf32>, vector<128x128xf32> -> vector<128x128xf32>
    %76 = math.exp %75 : vector<128x128xf32>
    %77 = tpu.concatenate %61, %1 in 0 : vector<2x128xf32>, vector<1x128xf32> -> vector<3x128xf32>
    %cst_33 = arith.constant dense<0.000000e+00> : vector<3x128xf32>
    %78 = tpu.matmul %77, %76, %cst_33 {dimension_numbers = #tpu.dot_dimension_numbers<[1], [0], [0], [1], [0, 0, 1, 1], [], []>} : vector<3x128xf32>, vector<128x128xf32>, vector<3x128xf32> -> vector<3x128xf32>
    %79 = vector.extract_strided_slice %78 {offsets = [2, 0], sizes = [1, 128], strides = [1, 1]} : vector<3x128xf32> to vector<1x128xf32>
    %cst_34 = arith.constant 41.0888138 : f32
    %80 = vector.broadcast %cst_34 : f32 to vector<1x128xf32>
    %81 = arith.subf %79, %80 : vector<1x128xf32>
    %82 = vector.extract_strided_slice %78 {offsets = [0, 0], sizes = [2, 128], strides = [1, 1]} : vector<3x128xf32> to vector<2x128xf32>
    %83 = tpu.reciprocal %81 {approx = true} : vector<1x128xf32> -> vector<1x128xf32>
    %84 = vector.broadcast %83 : vector<1x128xf32> to vector<2x128xf32>
    %85 = arith.mulf %82, %84 : vector<2x128xf32>
    %c2_35 = arith.constant 2 : index
    %c0_36 = arith.constant 0 : index
    %c0_37 = arith.constant 0 : index
    %86 = vector.load %arg3[%c2_35, %c0_36, %c0_37] : memref<4x2x128xf32, #tpu.memory_space<vmem>>, vector<1x2x128xf32>
    %87 = vector.shape_cast %86 : vector<1x2x128xf32> to vector<2x128xf32>
    %88 = vector.shape_cast %85 : vector<2x128xf32> to vector<1x2x128xf32>
    tpu.vector_store %arg3[%c2_35, %c0_36, %c0_37], %88 {strides = array<i32>} : memref<4x2x128xf32, #tpu.memory_space<vmem>>, vector<1x2x128xf32>,
    %c3 = arith.constant 3 : index
    %c0_38 = arith.constant 0 : index
    %c0_39 = arith.constant 0 : index
    %89 = vector.load %arg1[%c3, %c0_38, %c0_39] : memref<4x2x128xf32, #tpu.memory_space<vmem>>, vector<1x2x128xf32>
    %90 = vector.shape_cast %89 : vector<1x2x128xf32> to vector<2x128xf32>
    %cst_40 = arith.constant dense<0.000000e+00> : vector<2x128xf32>
    %91 = tpu.matmul %0, %90, %cst_40 {dimension_numbers = #tpu.dot_dimension_numbers<[1], [0], [0], [1], [0, 0, 1, 1], [], []>} : vector<2x2xf32>, vector<2x128xf32>, vector<2x128xf32> -> vector<2x128xf32>
    %92 = arith.mulf %91, %91 : vector<2x128xf32>
    %cst_41 = arith.constant dense<0.000000e+00> : vector<128xf32>
    %93 = vector.multi_reduction <add>, %92, %cst_41 [0] : vector<2x128xf32> to vector<128xf32>
    %94 = vector.shape_cast %93 : vector<128xf32> to vector<1x128xf32>
    %95 = math.sqrt %94 : vector<1x128xf32>
    %cst_42 = arith.constant 9.99999993E-9 : f32
    %96 = vector.broadcast %cst_42 : f32 to vector<1x128xf32>
    %97 = arith.addf %95, %96 : vector<1x128xf32>
    %98 = tpu.reciprocal %97 {approx = true} : vector<1x128xf32> -> vector<1x128xf32>
    %99 = vector.broadcast %98 : vector<1x128xf32> to vector<2x128xf32>
    %100 = arith.mulf %91, %99 : vector<2x128xf32>
    %101 = tpu.concatenate %100, %1 in 0 : vector<2x128xf32>, vector<1x128xf32> -> vector<3x128xf32>
    %cst_43 = arith.constant 2.500000e-01 : f32
    %102 = vector.broadcast %cst_43 : f32 to vector<3x128xf32>
    %103 = arith.mulf %101, %102 : vector<3x128xf32>
    %cst_44 = arith.constant dense<0.000000e+00> : vector<128x128xf32>
    %104 = tpu.matmul %103, %101, %cst_44 {dimension_numbers = #tpu.dot_dimension_numbers<[0], [0], [1], [1], [0, 1, 1, 1], [], []>} : vector<3x128xf32>, vector<3x128xf32>, vector<128x128xf32> -> vector<128x128xf32>
    %105 = math.exp %104 : vector<128x128xf32>
    %106 = tpu.concatenate %90, %1 in 0 : vector<2x128xf32>, vector<1x128xf32> -> vector<3x128xf32>
    %cst_45 = arith.constant dense<0.000000e+00> : vector<3x128xf32>
    %107 = tpu.matmul %106, %105, %cst_45 {dimension_numbers = #tpu.dot_dimension_numbers<[1], [0], [0], [1], [0, 0, 1, 1], [], []>} : vector<3x128xf32>, vector<128x128xf32>, vector<3x128xf32> -> vector<3x128xf32>
    %108 = vector.extract_strided_slice %107 {offsets = [2, 0], sizes = [1, 128], strides = [1, 1]} : vector<3x128xf32> to vector<1x128xf32>
    %cst_46 = arith.constant 41.0888138 : f32
    %109 = vector.broadcast %cst_46 : f32 to vector<1x128xf32>
    %110 = arith.subf %108, %109 : vector<1x128xf32>
    %111 = vector.extract_strided_slice %107 {offsets = [0, 0], sizes = [2, 128], strides = [1, 1]} : vector<3x128xf32> to vector<2x128xf32>
    %112 = tpu.reciprocal %110 {approx = true} : vector<1x128xf32> -> vector<1x128xf32>
    %113 = vector.broadcast %112 : vector<1x128xf32> to vector<2x128xf32>
    %114 = arith.mulf %111, %113 : vector<2x128xf32>
    %c3_47 = arith.constant 3 : index
    %c0_48 = arith.constant 0 : index
    %c0_49 = arith.constant 0 : index
    %115 = vector.load %arg3[%c3_47, %c0_48, %c0_49] : memref<4x2x128xf32, #tpu.memory_space<vmem>>, vector<1x2x128xf32>
    %116 = vector.shape_cast %115 : vector<1x2x128xf32> to vector<2x128xf32>
    %117 = vector.shape_cast %114 : vector<2x128xf32> to vector<1x2x128xf32>
    tpu.vector_store %arg3[%c3_47, %c0_48, %c0_49], %117 {strides = array<i32>} : memref<4x2x128xf32, #tpu.memory_space<vmem>>, vector<1x2x128xf32>,
    return
  }
  func.func @transform_0(%arg0: i32) -> (i32, i32, i32) {
    %c0_i32 = arith.constant 0 : i32
    %c0_i32_0 = arith.constant 0 : i32
    %c0_i32_1 = arith.constant 0 : i32
    return %arg0, %c0_i32, %c0_i32_0 : i32, i32, i32
  }
  func.func @transform_1(%arg0: i32) -> (i32, i32) {
    %c0_i32 = arith.constant 0 : i32
    %c0_i32_0 = arith.constant 0 : i32
    %c0_i32_1 = arith.constant 0 : i32
    return %c0_i32, %c0_i32_0 : i32, i32
  }
  func.func @transform_2(%arg0: i32) -> (i32, i32, i32) {
    %c0_i32 = arith.constant 0 : i32
    %c0_i32_0 = arith.constant 0 : i32
    %c0_i32_1 = arith.constant 0 : i32
    return %arg0, %c0_i32, %c0_i32_0 : i32, i32, i32
  }
}

</mosaic_0001>

<llo_original>
// kernel: forward.2
$region0: #{forward.2}
  #allocation0 [shape = 'u32[]', space=smem, size = 0x4, offset = 0x4, fixed_abs, tag = 'smem constant byte address 0x4 - core index']
  #allocation1 [shape = 'u32[72,128]{1,0:T(1,128)}', space=vmem, size = 0x9000, scoped, tag = 'internal scratch']
  %s0 = inlined_call_operand.vmem [shape: f32[2,6,128], index: 0, kind: input, shape index: {}]
  %s1 = inlined_call_operand.vmem [shape: f32[2,6,128], index: 1, kind: output, shape index: {}]
  %s2 = sld [smem:[#allocation0]]
  $region37: #{forward.2} parent=0
    _
  %s4 = ssub.s32 1, %s2
  %s5 = scalar_select 0, %s4, %s2
  loop: start=0, step=1, limit=4
  $region2: #{forward.2} parent=0 // loop_pre_header
    _
  $region3: #{forward.2} parent=0 // loop_header
    %s7 = sphi 0, %s11
    %p8 = scmp.ge.s32.totalorder %s7, 4
    %s17 = sphi 0, %s19
    %s20 = sphi 0, %s17
    %s21 = sphi 0, %s20
    %s37 = sphi 0, %s21
    %s43 = sphi 0, %s45
    %s46 = sphi 0, %s43
    %s47 = sphi 0, %s46
    %s63 = sphi 0, %s47
  $region4: #{forward.2} parent=0 // loop_header_branch
    %10 = sbr.rel (%p8) target = $region8
  $region5: #{forward.2} parent=0 // loop_body
    %s12 = ssub.s32 %s7, 1
    %s13 = ssub.s32 %s7, 2
    %s14 = sadd.s32 %s7, 1
    %s15 = ssub.s32 %s7, %s14
    %p16 = scmp.eq.s32.totalorder %s15, 0
    %s18 = sadd.s32 %s17, 1
    %s19 = scalar_select %p16, %s17, %s18
    %p22 = pneg %p16
    %p23 = scmp.eq.s32.totalorder %s7, 1
    %p24 = por %p22, %p23
    %p25 = scmp.ne.s32.totalorder %s17, %s20
    %p26 = scmp.eq.s32.totalorder %s7, 0
    %p27 = por %p25, %p26
    %p28 = scmp.ne.s32.totalorder %s17, %s20
    %p29 = scmp.eq.s32.totalorder %s12, 1
    %p30 = por %p28, %p29
    %p31 = scmp.ne.s32.totalorder %s20, %s21
    %p32 = scmp.eq.s32.totalorder %s12, 0
    %p33 = por %p31, %p32
    %p34 = scmp.ne.s32.totalorder %s20, %s21
    %p35 = scmp.eq.s32.totalorder %s13, 1
    %p36 = por %p34, %p35
    %p38 = scmp.ne.s32.totalorder %s21, %s37
    %p39 = scmp.eq.s32.totalorder %s13, 0
    %p40 = por %p38, %p39
    %s41 = ssub.s32 %s7, %s14
    %p42 = scmp.eq.s32.totalorder %s41, 0
    %s44 = sadd.s32 %s43, 1
    %s45 = scalar_select %p42, %s43, %s44
    %p48 = pneg %p42
    %p49 = scmp.eq.s32.totalorder %s7, 1
    %p50 = por %p48, %p49
    %p51 = scmp.ne.s32.totalorder %s43, %s46
    %p52 = scmp.eq.s32.totalorder %s7, 0
    %p53 = por %p51, %p52
    %p54 = scmp.ne.s32.totalorder %s43, %s46
    %p55 = scmp.eq.s32.totalorder %s12, 1
    %p56 = por %p54, %p55
    %p57 = scmp.ne.s32.totalorder %s46, %s47
    %p58 = scmp.eq.s32.totalorder %s12, 0
    %p59 = por %p57, %p58
    %p60 = scmp.ne.s32.totalorder %s46, %s47
    %p61 = scmp.eq.s32.totalorder %s13, 1
    %p62 = por %p60, %p61
    %p64 = scmp.ne.s32.totalorder %s47, %s63
    %p65 = scmp.eq.s32.totalorder %s13, 0
    %p66 = por %p64, %p65
    %p67 = scmp.le.s32.totalorder 1, %s7
    %p68 = scmp.lt.s32.totalorder %s7, 3
    %p69 = pnand %p67, %p68
    %p70 = pneg %p69
    // Predicated region
    $region9: #{forward.2} parent=5 // pred_check
      _
    $region10: #{forward.2} parent=5 // pred_check_branch
      %72 = sbr.rel (%p69) target = $region12
    $region11: #{forward.2} parent=5 // pred_region
      %s73 = ssub.s32 %s7, 1
    $region12: #{forward.2} parent=5 // pred_fallthru
      _
    %p74 = scmp.lt.s32.totalorder %s7, 2
    // Predicated region
    $region13: #{forward.2} parent=5 // pred_check
      %p75 = pneg %p74
    $region14: #{forward.2} parent=5 // pred_check_branch
      %77 = sbr.rel (%p75) target = $region16
    $region15: #{forward.2} parent=5 // pred_region
      // Predicated region
      $region17: #{forward.2} parent=15 // pred_check
        %p78 = pneg %p27
      $region18: #{forward.2} parent=15 // pred_check_branch
        %80 = sbr.rel (%p78) target = $region20
      $region19: #{forward.2} parent=15 // pred_region
        %p81 = scmp.lt.s32.totalorder %s7, 1
        %s82 = scalar_select %p81, %s7, 1
        %s83 = smul.addr %s82, 8
        %s84 = scalar_lea.vmem %s0, %s83
      $region20: #{forward.2} parent=15 // pred_fallthru
        _
    $region16: #{forward.2} parent=5 // pred_fallthru
      _
    %p85 = scmp.le.s32.totalorder 1, %s7
    %p86 = scmp.lt.s32.totalorder %s7, 3
    %p87 = pnand %p85, %p86
    %p88 = pneg %p87
    // Predicated region
    $region21: #{forward.2} parent=5 // pred_check
      _
    $region22: #{forward.2} parent=5 // pred_check_branch
      %90 = sbr.rel (%p87) target = $region24
    $region23: #{forward.2} parent=5 // pred_region
      %s91 = ssub.s32 %s7, 1
      %p92 = scmp.lt.s32.totalorder %s12, 1
      %s93 = scalar_select %p92, %s12, 1
      %s94 = smul.addr %s93, 8
      %s95 = scalar_lea.vmem %s0, %s94
      %p96 = pneg %p33
      %p97 = pneg %p30
      %p98 = pneg %p59
      %p99 = pneg %p56
      %p100 = scmp.lt.s32.totalorder %s12, 1
      %s101 = scalar_select %p100, %s12, 1
      %s102 = smul.addr %s101, 8
      %s103 = scalar_lea.vmem %s1, %s102
      %p104 = scmp.lt.s32.totalorder %s12, 1
      %s105 = scalar_select %p104, %s12, 1
      %s106 = smul.addr %s105, 8
      %s107 = scalar_lea.vmem %s0, %s106
      %p108 = scmp.lt.s32.totalorder %s12, 1
      %s109 = scalar_select %p108, %s12, 1
      %s110 = smul.addr %s109, 8
      %s111 = scalar_lea.vmem %s1, %s110
      %v112 = vld [vmem:[%s107] sm:$0x3f]
      %vm113 = vcmask 1045504
      %v114 = vsel %vm113, %v112, 0.0
      %115 = vadd.xlane.f32.xlu0 %v114
      %v116 = vpop.xlane.xlu0 %115
      %v117 = vsel %vm113, %v116, 0.0
      %v118 = vrot.slane %v117, 4
      %v119 = vadd.f32 %v117, %v118
      %v120 = vrot.slane %v119, 2
      %v121 = vadd.f32 %v119, %v120
      %v122 = vrot.slane %v121, 1
      %v123 = vadd.f32 %v121, %v122
      %v124 = vmul.f32 %v112, %v112
      %v125 = vsel %vm113, %v124, 0.0
      %126 = vadd.xlane.f32.xlu0 %v125
      %v127 = vpop.xlane.xlu0 %126
      %v128 = vsel %vm113, %v127, 0.0
      %v129 = vrot.slane %v128, 4
      %v130 = vadd.f32 %v128, %v129
      %v131 = vrot.slane %v130, 2
      %v132 = vadd.f32 %v130, %v131
      %v133 = vrot.slane %v132, 1
      %v134 = vadd.f32 %v132, %v133
      %v135 = vmul.f32 %v123, 0.0013020834
      %v136 = vmul.f32 %v134, 0.0013020834
      %v137 = vmul.f32 %v135, %v135
      %v138 = vsub.f32 %v136, %v137
      %v139 = vsub.f32 %v112, %v135
      %v140 = vadd.f32 %v138, 1e-05
      %v141 = vrsqrt.pop %v140
      %v142 = vmul.f32 %v141, %v140
      %v143 = vmul.f32 %v142, %v141
      %v144 = vmul.f32 0.5, %v143
      %v145 = vsub.f32 1.5, %v144
      %v146 = vmul.f32 %v141, %v145
      %vm147 = vweird.f32 %v140
      %vm148 = vweird.f32 %v141
      %vm149 = vmor %vm147, %vm148
      %v150 = vsel %vm149, %v141, %v146
      %v151 = vmul.f32 %v139, %v150
      %152 = vst [vmem:[%s111] sm:$0x3f] %v151
      %p153 = scmp.lt.s32.totalorder %s12, 1
      %s154 = scalar_select %p153, %s12, 1
      %s155 = smul.addr %s154, 8
      %s156 = scalar_lea.vmem %s1, %s155
      // Predicated region
      $region25: #{forward.2} parent=23 // pred_check
        %p157 = pneg %p56
      $region26: #{forward.2} parent=23 // pred_check_branch
        %159 = sbr.rel (%p157) target = $region28
      $region27: #{forward.2} parent=23 // pred_region
        _
      $region28: #{forward.2} parent=23 // pred_fallthru
        _
    $region24: #{forward.2} parent=5 // pred_fallthru
      _
    %p160 = scmp.le.s32.totalorder 2, %s7
    // Predicated region
    $region29: #{forward.2} parent=5 // pred_check
      %p161 = pneg %p160
    $region30: #{forward.2} parent=5 // pred_check_branch
      %163 = sbr.rel (%p161) target = $region32
    $region31: #{forward.2} parent=5 // pred_region
      %s164 = ssub.s32 %s7, 2
      // Predicated region
      $region33: #{forward.2} parent=31 // pred_check
        %p165 = pneg %p62
      $region34: #{forward.2} parent=31 // pred_check_branch
        %167 = sbr.rel (%p165) target = $region36
      $region35: #{forward.2} parent=31 // pred_region
        %p168 = scmp.lt.s32.totalorder %s13, 1
        %s169 = scalar_select %p168, %s13, 1
        %s170 = smul.addr %s169, 8
        %s171 = scalar_lea.vmem %s1, %s170
      $region36: #{forward.2} parent=31 // pred_fallthru
        _
    $region32: #{forward.2} parent=5 // pred_fallthru
      _
  $region6: #{forward.2} parent=0 // loop_footer
    %s11 = sadd.s32 1, %s7
  $region7: #{forward.2} parent=0 // loop_footer_branch
    %6 = sbr.rel target = $region3
  $region8: #{forward.2} parent=0 // loop_exit
    _

// kernel: forward.3
$region0: #{forward.3}
  #allocation0 [shape = 'u32[]', space=smem, size = 0x4, offset = 0x4, fixed_abs, tag = 'smem constant byte address 0x4 - core index']
  #allocation1 [shape = 'u32[72,128]{1,0:T(1,128)}', space=vmem, size = 0x9000, scoped, tag = 'internal scratch']
  %s0 = inlined_call_operand.vmem [shape: f32[8,2,128], index: 0, kind: input, shape index: {}]
  %s1 = inlined_call_operand.vmem [shape: f32[2,2], index: 1, kind: input, shape index: {}]
  %s2 = inlined_call_operand.vmem [shape: f32[8,2,128], index: 2, kind: output, shape index: {}]
  %s3 = sld [smem:[#allocation0]]
  $region41: #{forward.3} parent=0
    _
  %s5 = ssub.s32 1, %s3
  %s6 = scalar_select 0, %s5, %s3
  loop: start=0, step=1, limit=4
  $region2: #{forward.3} parent=0 // loop_pre_header
    _
  $region3: #{forward.3} parent=0 // loop_header
    %s8 = sphi 0, %s12
    %p9 = scmp.ge.s32.totalorder %s8, 4
    %s18 = sphi 0, %s20
    %s21 = sphi 0, %s18
    %s22 = sphi 0, %s21
    %s38 = sphi 0, %s22
    %s42 = sphi 0, %s42
    %s44 = sphi 0, %s42
    %s45 = sphi 0, %s44
    %s59 = sphi 0, %s45
    %s65 = sphi 0, %s67
    %s68 = sphi 0, %s65
    %s69 = sphi 0, %s68
    %s85 = sphi 0, %s69
  $region4: #{forward.3} parent=0 // loop_header_branch
    %11 = sbr.rel (%p9) target = $region8
  $region5: #{forward.3} parent=0 // loop_body
    %s13 = ssub.s32 %s8, 1
    %s14 = ssub.s32 %s8, 2
    %s15 = sadd.s32 %s8, 1
    %s16 = ssub.s32 %s8, %s15
    %p17 = scmp.eq.s32.totalorder %s16, 0
    %s19 = sadd.s32 %s18, 1
    %s20 = scalar_select %p17, %s18, %s19
    %p23 = pneg %p17
    %p24 = scmp.eq.s32.totalorder %s8, 1
    %p25 = por %p23, %p24
    %p26 = scmp.ne.s32.totalorder %s18, %s21
    %p27 = scmp.eq.s32.totalorder %s8, 0
    %p28 = por %p26, %p27
    %p29 = scmp.ne.s32.totalorder %s18, %s21
    %p30 = scmp.eq.s32.totalorder %s13, 1
    %p31 = por %p29, %p30
    %p32 = scmp.ne.s32.totalorder %s21, %s22
    %p33 = scmp.eq.s32.totalorder %s13, 0
    %p34 = por %p32, %p33
    %p35 = scmp.ne.s32.totalorder %s21, %s22
    %p36 = scmp.eq.s32.totalorder %s14, 1
    %p37 = por %p35, %p36
    %p39 = scmp.ne.s32.totalorder %s22, %s38
    %p40 = scmp.eq.s32.totalorder %s14, 0
    %p41 = por %p39, %p40
    %s43 = sadd.s32 %s42, 1
    %p46 = scmp.eq.s32.totalorder %s8, 1
    %p47 = scmp.ne.s32.totalorder %s42, %s44
    %p48 = scmp.eq.s32.totalorder %s8, 0
    %p49 = por %p47, %p48
    %p50 = scmp.ne.s32.totalorder %s42, %s44
    %p51 = scmp.eq.s32.totalorder %s13, 1
    %p52 = por %p50, %p51
    %p53 = scmp.ne.s32.totalorder %s44, %s45
    %p54 = scmp.eq.s32.totalorder %s13, 0
    %p55 = por %p53, %p54
    %p56 = scmp.ne.s32.totalorder %s44, %s45
    %p57 = scmp.eq.s32.totalorder %s14, 1
    %p58 = por %p56, %p57
    %p60 = scmp.ne.s32.totalorder %s45, %s59
    %p61 = scmp.eq.s32.totalorder %s14, 0
    %p62 = por %p60, %p61
    %s63 = ssub.s32 %s8, %s15
    %p64 = scmp.eq.s32.totalorder %s63, 0
    %s66 = sadd.s32 %s65, 1
    %s67 = scalar_select %p64, %s65, %s66
    %p70 = pneg %p64
    %p71 = scmp.eq.s32.totalorder %s8, 1
    %p72 = por %p70, %p71
    %p73 = scmp.ne.s32.totalorder %s65, %s68
    %p74 = scmp.eq.s32.totalorder %s8, 0
    %p75 = por %p73, %p74
    %p76 = scmp.ne.s32.totalorder %s65, %s68
    %p77 = scmp.eq.s32.totalorder %s13, 1
    %p78 = por %p76, %p77
    %p79 = scmp.ne.s32.totalorder %s68, %s69
    %p80 = scmp.eq.s32.totalorder %s13, 0
    %p81 = por %p79, %p80
    %p82 = scmp.ne.s32.totalorder %s68, %s69
    %p83 = scmp.eq.s32.totalorder %s14, 1
    %p84 = por %p82, %p83
    %p86 = scmp.ne.s32.totalorder %s69, %s85
    %p87 = scmp.eq.s32.totalorder %s14, 0
    %p88 = por %p86, %p87
    %p89 = scmp.le.s32.totalorder 1, %s8
    %p90 = scmp.lt.s32.totalorder %s8, 3
    %p91 = pnand %p89, %p90
    %p92 = pneg %p91
    // Predicated region
    $region9: #{forward.3} parent=5 // pred_check
      _
    $region10: #{forward.3} parent=5 // pred_check_branch
      %94 = sbr.rel (%p91) target = $region12
    $region11: #{forward.3} parent=5 // pred_region
      %s95 = ssub.s32 %s8, 1
      // Predicated region
      $region13: #{forward.3} parent=11 // pred_check
        %p96 = pneg %p55
      $region14: #{forward.3} parent=11 // pred_check_branch
        %98 = sbr.rel (%p96) target = $region16
      $region15: #{forward.3} parent=11 // pred_region
        _
      $region16: #{forward.3} parent=11 // pred_fallthru
        _
    $region12: #{forward.3} parent=5 // pred_fallthru
      _
    %p99 = scmp.lt.s32.totalorder %s8, 2
    // Predicated region
    $region17: #{forward.3} parent=5 // pred_check
      %p100 = pneg %p99
    $region18: #{forward.3} parent=5 // pred_check_branch
      %102 = sbr.rel (%p100) target = $region20
    $region19: #{forward.3} parent=5 // pred_region
      // Predicated region
      $region21: #{forward.3} parent=19 // pred_check
        %p103 = pneg %p28
      $region22: #{forward.3} parent=19 // pred_check_branch
        %105 = sbr.rel (%p103) target = $region24
      $region23: #{forward.3} parent=19 // pred_region
        %s106 = smul.u32 4, %s8
        %p107 = scmp.lt.s32.totalorder %s106, 7
        %s108 = scalar_select %p107, %s106, 7
        %s109 = smul.addr %s108, 2
        %s110 = scalar_lea.vmem %s0, %s109
        %s111 = smul.u32 4, %s8
      $region24: #{forward.3} parent=19 // pred_fallthru
        _
    $region20: #{forward.3} parent=5 // pred_fallthru
      _
    %p112 = scmp.le.s32.totalorder 1, %s8
    %p113 = scmp.lt.s32.totalorder %s8, 3
    %p114 = pnand %p112, %p113
    %p115 = pneg %p114
    // Predicated region
    $region25: #{forward.3} parent=5 // pred_check
      _
    $region26: #{forward.3} parent=5 // pred_check_branch
      %117 = sbr.rel (%p114) target = $region28
    $region27: #{forward.3} parent=5 // pred_region
      %s118 = ssub.s32 %s8, 1
      %s119 = smul.u32 4, %s13
      %p120 = scmp.lt.s32.totalorder %s119, 7
      %s121 = scalar_select %p120, %s119, 7
      %s122 = smul.addr %s121, 2
      %s123 = scalar_lea.vmem %s0, %s122
      %p124 = pneg %p34
      %p125 = pneg %p31
      %p126 = pneg %p55
      %p127 = pneg %p52
      %p128 = pneg %p81
      %p129 = pneg %p78
      %s130 = smul.u32 4, %s13
      %p131 = scmp.lt.s32.totalorder %s130, 7
      %s132 = scalar_select %p131, %s130, 7
      %s133 = smul.addr %s132, 2
      %s134 = scalar_lea.vmem %s2, %s133
      %s135 = smul.u32 4, %s13
      %p136 = scmp.lt.s32.totalorder %s135, 7
      %s137 = scalar_select %p136, %s135, 7
      %s138 = smul.addr %s137, 2
      %s139 = scalar_lea.vmem %s0, %s138
      %s140 = smul.u32 4, %s13
      %s141 = smul.u32 4, %s13
      %p142 = scmp.lt.s32.totalorder %s141, 7
      %s143 = scalar_select %p142, %s141, 7
      %s144 = smul.addr %s143, 2
      %s145 = scalar_lea.vmem %s2, %s144
      %s146 = smul.u32 4, %s13
      %v147 = vld [vmem:[%s1] sm:$0x3]
      %v148 = vld [vmem:[%s139] sm:$0x3]
      %vm149 = vcmask 15360
      %v151 = vsel %vm149, %v147, 0
      %vm153 = vcmask 1041408
      %v155 = vsel %vm153, %v148, 0
      %157 = vmatpush.msra.mxu0 0.0
      %158 = vmatpush.msra.mxu0 0.0
      %159 = vmatpush.msra.mxu0 0.0
      %160 = vmatpush.msra.mxu0 0.0
      %161 = vmatpush.msra.mxu0 0.0
      %162 = vmatpush.msra.mxu0 0.0
      %163 = vmatpush.msra.mxu0 0.0
      %164 = vmatpush.msra.mxu0 0.0
      %165 = vmatpush.msra.mxu0 0.0
      %166 = vmatpush.msra.mxu0 0.0
      %167 = vmatpush.msra.mxu0 0.0
      %168 = vmatpush.msra.mxu0 0.0
      %169 = vmatpush.msra.mxu0 0.0
      %170 = vmatpush.msra.mxu0 0.0
      %171 = vmatpush.msra.mxu0 0.0
      %172 = vmatpush.msra.mxu0 %v155
      %173 = vmatmul.f32.gmra.mxu0 %v151
      %v174 = vpop.f32.mrf.mxu0
      %v175 = vadd.f32 0.0, %v174
      %176 = vdwg.mxu0
      %v177 = vmul.f32 %v175, %v175
      %v178 = vsel %vm153, %v177, 0.0
      %v179 = vrot.slane %v178, 4
      %v180 = vadd.f32 %v178, %v179
      %v181 = vrot.slane %v180, 2
      %v182 = vadd.f32 %v180, %v181
      %v183 = vrot.slane %v182, 1
      %v184 = vadd.f32 %v182, %v183
      %v185 = vrsqrt.pop %v184
      %v186 = vmul.f32 %v185, %v184
      %v187 = vmul.f32 %v186, %v185
      %v188 = vmul.f32 0.5, %v187
      %v189 = vsub.f32 1.5, %v188
      %v190 = vmul.f32 %v185, %v189
      %v191 = vmul.f32 %v184, %v190
      %vm192 = vcmp.eq.f32.partialorder %v184, inf
      %v193 = vsel %vm192, %v184, %v191
      %vm194 = vcmp.eq.f32.partialorder %v184, 0.0
      %v195 = vand.u32 %v184, 2147483648
      %v196 = vsel %vm194, %v195, %v193
      %v197 = vadd.f32 %v196, 1e-08
      %v198 = vrcp.pop %v197
      %v199 = vmul.f32 %v175, %v198
      %v200 = vsel %vm153, %v199, 1.0
      %v201 = vmul.f32 %v200, 0.25
      %202 = vxpose.xlu0.b32.start [1/16] %v201, 128
      %203 = vxpose.xlu0.b32.cont [2/16] 0.0, 128
      %204 = vxpose.xlu0.b32.cont [3/16] 0.0, 128
      %205 = vxpose.xlu0.b32.cont [4/16] 0.0, 128
      %206 = vxpose.xlu0.b32.cont [5/16] 0.0, 128
      %207 = vxpose.xlu0.b32.cont [6/16] 0.0, 128
      %208 = vxpose.xlu0.b32.cont [7/16] 0.0, 128
      %209 = vxpose.xlu0.b32.cont [8/16] 0.0, 128
      %210 = vxpose.xlu0.b32.cont [9/16] 0.0, 128
      %211 = vxpose.xlu0.b32.cont [10/16] 0.0, 128
      %212 = vxpose.xlu0.b32.cont [11/16] 0.0, 128
      %213 = vxpose.xlu0.b32.cont [12/16] 0.0, 128
      %214 = vxpose.xlu0.b32.cont [13/16] 0.0, 128
      %215 = vxpose.xlu0.b32.cont [14/16] 0.0, 128
      %216 = vxpose.xlu0.b32.cont [15/16] 0.0, 128
      %217 = vxpose.xlu0.b32.end [16/16] 0.0, 128
      %v218 = vpop.trf.xlu0
      %v219 = vpop.trf.xlu0
      %v220 = vpop.trf.xlu0
      %v221 = vpop.trf.xlu0
      %v222 = vpop.trf.xlu0
      %v223 = vpop.trf.xlu0
      %v224 = vpop.trf.xlu0
      %v225 = vpop.trf.xlu0
      %v226 = vpop.trf.xlu0
      %v227 = vpop.trf.xlu0
      %v228 = vpop.trf.xlu0
      %v229 = vpop.trf.xlu0
      %v230 = vpop.trf.xlu0
      %v231 = vpop.trf.xlu0
      %v232 = vpop.trf.xlu0
      %v233 = vpop.trf.xlu0
      %vm234 = vcmask 23552
      %v236 = vsel %vm234, %v218, 0
      %v239 = vsel %vm234, %v219, 0
      %v242 = vsel %vm234, %v220, 0
      %v245 = vsel %vm234, %v221, 0
      %v248 = vsel %vm234, %v222, 0
      %v251 = vsel %vm234, %v223, 0
      %v254 = vsel %vm234, %v224, 0
      %v257 = vsel %vm234, %v225, 0
      %v260 = vsel %vm234, %v226, 0
      %v263 = vsel %vm234, %v227, 0
      %v266 = vsel %vm234, %v228, 0
      %v269 = vsel %vm234, %v229, 0
      %v272 = vsel %vm234, %v230, 0
      %v275 = vsel %vm234, %v231, 0
      %v278 = vsel %vm234, %v232, 0
      %v281 = vsel %vm234, %v233, 0
      %vm283 = vcmask 1042432
      %v285 = vsel %vm283, %v200, 0
      %287 = vmatpush.msra.mxu0 0.0
      %288 = vmatpush.msra.mxu0 0.0
      %289 = vmatpush.msra.mxu0 0.0
      %290 = vmatpush.msra.mxu0 0.0
      %291 = vmatpush.msra.mxu0 0.0
      %292 = vmatpush.msra.mxu0 0.0
      %293 = vmatpush.msra.mxu0 0.0
      %294 = vmatpush.msra.mxu0 0.0
      %295 = vmatpush.msra.mxu0 0.0
      %296 = vmatpush.msra.mxu0 0.0
      %297 = vmatpush.msra.mxu0 0.0
      %298 = vmatpush.msra.mxu0 0.0
      %299 = vmatpush.msra.mxu0 0.0
      %300 = vmatpush.msra.mxu0 0.0
      %301 = vmatpush.msra.mxu0 0.0
      %302 = vmatpush.msra.mxu0 %v285
      %303 = vmatmul.f32.gmra.mxu0 %v236
      %v304 = vpop.f32.mrf.mxu0
      %v305 = vadd.f32 0.0, %v304
      %306 = vmatmul.f32.gmra.mxu0 %v239
      %v307 = vpop.f32.mrf.mxu0
      %v308 = vadd.f32 0.0, %v307
      %309 = vmatmul.f32.gmra.mxu0 %v242
      %v310 = vpop.f32.mrf.mxu0
      %v311 = vadd.f32 0.0, %v310
      %312 = vmatmul.f32.gmra.mxu0 %v245
      %v313 = vpop.f32.mrf.mxu0
      %v314 = vadd.f32 0.0, %v313
      %315 = vmatmul.f32.gmra.mxu0 %v248
      %v316 = vpop.f32.mrf.mxu0
      %v317 = vadd.f32 0.0, %v316
      %318 = vmatmul.f32.gmra.mxu0 %v251
      %v319 = vpop.f32.mrf.mxu0
      %v320 = vadd.f32 0.0, %v319
      %321 = vmatmul.f32.gmra.mxu0 %v254
      %v322 = vpop.f32.mrf.mxu0
      %v323 = vadd.f32 0.0, %v322
      %324 = vmatmul.f32.gmra.mxu0 %v257
      %v325 = vpop.f32.mrf.mxu0
      %v326 = vadd.f32 0.0, %v325
      %327 = vmatmul.f32.gmra.mxu0 %v260
      %v328 = vpop.f32.mrf.mxu0
      %v329 = vadd.f32 0.0, %v328
      %330 = vmatmul.f32.gmra.mxu0 %v263
      %v331 = vpop.f32.mrf.mxu0
      %v332 = vadd.f32 0.0, %v331
      %333 = vmatmul.f32.gmra.mxu0 %v266
      %v334 = vpop.f32.mrf.mxu0
      %v335 = vadd.f32 0.0, %v334
      %336 = vmatmul.f32.gmra.mxu0 %v269
      %v337 = vpop.f32.mrf.mxu0
      %v338 = vadd.f32 0.0, %v337
      %339 = vmatmul.f32.gmra.mxu0 %v272
      %v340 = vpop.f32.mrf.mxu0
      %v341 = vadd.f32 0.0, %v340
      %342 = vmatmul.f32.gmra.mxu0 %v275
      %v343 = vpop.f32.mrf.mxu0
      %v344 = vadd.f32 0.0, %v343
      %345 = vmatmul.f32.gmra.mxu0 %v278
      %v346 = vpop.f32.mrf.mxu0
      %v347 = vadd.f32 0.0, %v346
      %348 = vmatmul.f32.gmra.mxu0 %v281
      %v349 = vpop.f32.mrf.mxu0
      %v350 = vadd.f32 0.0, %v349
      %351 = vdwg.mxu0
      %v352 = vmul.f32 %v305, 1.442695
      %v353 = vpow.pop %v352
      %v354 = vmul.f32 %v308, 1.442695
      %v355 = vpow.pop %v354
      %v356 = vmul.f32 %v311, 1.442695
      %v357 = vpow.pop %v356
      %v358 = vmul.f32 %v314, 1.442695
      %v359 = vpow.pop %v358
      %v360 = vmul.f32 %v317, 1.442695
      %v361 = vpow.pop %v360
      %v362 = vmul.f32 %v320, 1.442695
      %v363 = vpow.pop %v362
      %v364 = vmul.f32 %v323, 1.442695
      %v365 = vpow.pop %v364
      %v366 = vmul.f32 %v326, 1.442695
      %v367 = vpow.pop %v366
      %v368 = vmul.f32 %v329, 1.442695
      %v369 = vpow.pop %v368
      %v370 = vmul.f32 %v332, 1.442695
      %v371 = vpow.pop %v370
      %v372 = vmul.f32 %v335, 1.442695
      %v373 = vpow.pop %v372
      %v374 = vmul.f32 %v338, 1.442695
      %v375 = vpow.pop %v374
      %v376 = vmul.f32 %v341, 1.442695
      %v377 = vpow.pop %v376
      %v378 = vmul.f32 %v344, 1.442695
      %v379 = vpow.pop %v378
      %v380 = vmul.f32 %v347, 1.442695
      %v381 = vpow.pop %v380
      %v382 = vmul.f32 %v350, 1.442695
      %v383 = vpow.pop %v382
      %v384 = vsel %vm153, %v148, 1.0
      %385 = vmatpush.msra.mxu0 %v383
      %386 = vmatpush.msra.mxu0 %v381
      %387 = vmatpush.msra.mxu0 %v379
      %388 = vmatpush.msra.mxu0 %v377
      %389 = vmatpush.msra.mxu0 %v375
      %390 = vmatpush.msra.mxu0 %v373
      %391 = vmatpush.msra.mxu0 %v371
      %392 = vmatpush.msra.mxu0 %v369
      %393 = vmatpush.msra.mxu0 %v367
      %394 = vmatpush.msra.mxu0 %v365
      %395 = vmatpush.msra.mxu0 %v363
      %396 = vmatpush.msra.mxu0 %v361
      %397 = vmatpush.msra.mxu0 %v359
      %398 = vmatpush.msra.mxu0 %v357
      %399 = vmatpush.msra.mxu0 %v355
      %400 = vmatpush.msra.mxu0 %v353
      %401 = vmatmul.f32.gmra.mxu0 %v384
      %v402 = vpop.f32.mrf.mxu0
      %v403 = vadd.f32 0.0, %v402
      %404 = vdwg.mxu0
      %v405 = vsub.f32 %v403, 41.088814
      %v406 = vrcp.pop %v405
      %v407 = vperm.slane %v406, 2
      %v408 = vmul.f32 %v403, %v407
      %409 = vst [vmem:[%s145] sm:$0x3] %v408
      %s410 = scalar_lea.vmem %s139, 2
      %v411 = vld [vmem:[%s410] sm:$0x3]
      %v413 = vsel %vm153, %v411, 0
      %415 = vmatpush.msra.mxu0 0.0
      %416 = vmatpush.msra.mxu0 0.0
      %417 = vmatpush.msra.mxu0 0.0
      %418 = vmatpush.msra.mxu0 0.0
      %419 = vmatpush.msra.mxu0 0.0
      %420 = vmatpush.msra.mxu0 0.0
      %421 = vmatpush.msra.mxu0 0.0
      %422 = vmatpush.msra.mxu0 0.0
      %423 = vmatpush.msra.mxu0 0.0
      %424 = vmatpush.msra.mxu0 0.0
      %425 = vmatpush.msra.mxu0 0.0
      %426 = vmatpush.msra.mxu0 0.0
      %427 = vmatpush.msra.mxu0 0.0
      %428 = vmatpush.msra.mxu0 0.0
      %429 = vmatpush.msra.mxu0 0.0
      %430 = vmatpush.msra.mxu0 %v413
      %431 = vmatmul.f32.gmra.mxu0 %v151
      %v432 = vpop.f32.mrf.mxu0
      %v433 = vadd.f32 0.0, %v432
      %434 = vdwg.mxu0
      %v435 = vmul.f32 %v433, %v433
      %v436 = vsel %vm153, %v435, 0.0
      %v437 = vrot.slane %v436, 4
      %v438 = vadd.f32 %v436, %v437
      %v439 = vrot.slane %v438, 2
      %v440 = vadd.f32 %v438, %v439
      %v441 = vrot.slane %v440, 1
      %v442 = vadd.f32 %v440, %v441
      %v443 = vrsqrt.pop %v442
      %v444 = vmul.f32 %v443, %v442
      %v445 = vmul.f32 %v444, %v443
      %v446 = vmul.f32 0.5, %v445
      %v447 = vsub.f32 1.5, %v446
      %v448 = vmul.f32 %v443, %v447
      %v449 = vmul.f32 %v442, %v448
      %vm450 = vcmp.eq.f32.partialorder %v442, inf
      %v451 = vsel %vm450, %v442, %v449
      %vm452 = vcmp.eq.f32.partialorder %v442, 0.0
      %v453 = vand.u32 %v442, 2147483648
      %v454 = vsel %vm452, %v453, %v451
      %v455 = vadd.f32 %v454, 1e-08
      %v456 = vrcp.pop %v455
      %v457 = vmul.f32 %v433, %v456
      %v458 = vsel %vm153, %v457, 1.0
      %v459 = vmul.f32 %v458, 0.25
      %460 = vxpose.xlu0.b32.start [1/16] %v459, 128
      %461 = vxpose.xlu0.b32.cont [2/16] 0.0, 128
      %462 = vxpose.xlu0.b32.cont [3/16] 0.0, 128
      %463 = vxpose.xlu0.b32.cont [4/16] 0.0, 128
      %464 = vxpose.xlu0.b32.cont [5/16] 0.0, 128
      %465 = vxpose.xlu0.b32.cont [6/16] 0.0, 128
      %466 = vxpose.xlu0.b32.cont [7/16] 0.0, 128
      %467 = vxpose.xlu0.b32.cont [8/16] 0.0, 128
      %468 = vxpose.xlu0.b32.cont [9/16] 0.0, 128
      %469 = vxpose.xlu0.b32.cont [10/16] 0.0, 128
      %470 = vxpose.xlu0.b32.cont [11/16] 0.0, 128
      %471 = vxpose.xlu0.b32.cont [12/16] 0.0, 128
      %472 = vxpose.xlu0.b32.cont [13/16] 0.0, 128
      %473 = vxpose.xlu0.b32.cont [14/16] 0.0, 128
      %474 = vxpose.xlu0.b32.cont [15/16] 0.0, 128
      %475 = vxpose.xlu0.b32.end [16/16] 0.0, 128
      %v476 = vpop.trf.xlu0
      %v477 = vpop.trf.xlu0
      %v478 = vpop.trf.xlu0
      %v479 = vpop.trf.xlu0
      %v480 = vpop.trf.xlu0
      %v481 = vpop.trf.xlu0
      %v482 = vpop.trf.xlu0
      %v483 = vpop.trf.xlu0
      %v484 = vpop.trf.xlu0
      %v485 = vpop.trf.xlu0
      %v486 = vpop.trf.xlu0
      %v487 = vpop.trf.xlu0
      %v488 = vpop.trf.xlu0
      %v489 = vpop.trf.xlu0
      %v490 = vpop.trf.xlu0
      %v491 = vpop.trf.xlu0
      %v493 = vsel %vm234, %v476, 0
      %v496 = vsel %vm234, %v477, 0
      %v499 = vsel %vm234, %v478, 0
      %v502 = vsel %vm234, %v479, 0
      %v505 = vsel %vm234, %v480, 0
      %v508 = vsel %vm234, %v481, 0
      %v511 = vsel %vm234, %v482, 0
      %v514 = vsel %vm234, %v483, 0
      %v517 = vsel %vm234, %v484, 0
      %v520 = vsel %vm234, %v485, 0
      %v523 = vsel %vm234, %v486, 0
      %v526 = vsel %vm234, %v487, 0
      %v529 = vsel %vm234, %v488, 0
      %v532 = vsel %vm234, %v489, 0
      %v535 = vsel %vm234, %v490, 0
      %v538 = vsel %vm234, %v491, 0
      %v541 = vsel %vm283, %v458, 0
      %543 = vmatpush.msra.mxu0 0.0
      %544 = vmatpush.msra.mxu0 0.0
      %545 = vmatpush.msra.mxu0 0.0
      %546 = vmatpush.msra.mxu0 0.0
      %547 = vmatpush.msra.mxu0 0.0
      %548 = vmatpush.msra.mxu0 0.0
      %549 = vmatpush.msra.mxu0 0.0
      %550 = vmatpush.msra.mxu0 0.0
      %551 = vmatpush.msra.mxu0 0.0
      %552 = vmatpush.msra.mxu0 0.0
      %553 = vmatpush.msra.mxu0 0.0
      %554 = vmatpush.msra.mxu0 0.0
      %555 = vmatpush.msra.mxu0 0.0
      %556 = vmatpush.msra.mxu0 0.0
      %557 = vmatpush.msra.mxu0 0.0
      %558 = vmatpush.msra.mxu0 %v541
      %559 = vmatmul.f32.gmra.mxu0 %v493
      %v560 = vpop.f32.mrf.mxu0
      %v561 = vadd.f32 0.0, %v560
      %562 = vmatmul.f32.gmra.mxu0 %v496
      %v563 = vpop.f32.mrf.mxu0
      %v564 = vadd.f32 0.0, %v563
      %565 = vmatmul.f32.gmra.mxu0 %v499
      %v566 = vpop.f32.mrf.mxu0
      %v567 = vadd.f32 0.0, %v566
      %568 = vmatmul.f32.gmra.mxu0 %v502
      %v569 = vpop.f32.mrf.mxu0
      %v570 = vadd.f32 0.0, %v569
      %571 = vmatmul.f32.gmra.mxu0 %v505
      %v572 = vpop.f32.mrf.mxu0
      %v573 = vadd.f32 0.0, %v572
      %574 = vmatmul.f32.gmra.mxu0 %v508
      %v575 = vpop.f32.mrf.mxu0
      %v576 = vadd.f32 0.0, %v575
      %577 = vmatmul.f32.gmra.mxu0 %v511
      %v578 = vpop.f32.mrf.mxu0
      %v579 = vadd.f32 0.0, %v578
      %580 = vmatmul.f32.gmra.mxu0 %v514
      %v581 = vpop.f32.mrf.mxu0
      %v582 = vadd.f32 0.0, %v581
      %583 = vmatmul.f32.gmra.mxu0 %v517
      %v584 = vpop.f32.mrf.mxu0
      %v585 = vadd.f32 0.0, %v584
      %586 = vmatmul.f32.gmra.mxu0 %v520
      %v587 = vpop.f32.mrf.mxu0
      %v588 = vadd.f32 0.0, %v587
      %589 = vmatmul.f32.gmra.mxu0 %v523
      %v590 = vpop.f32.mrf.mxu0
      %v591 = vadd.f32 0.0, %v590
      %592 = vmatmul.f32.gmra.mxu0 %v526
      %v593 = vpop.f32.mrf.mxu0
      %v594 = vadd.f32 0.0, %v593
      %595 = vmatmul.f32.gmra.mxu0 %v529
      %v596 = vpop.f32.mrf.mxu0
      %v597 = vadd.f32 0.0, %v596
      %598 = vmatmul.f32.gmra.mxu0 %v532
      %v599 = vpop.f32.mrf.mxu0
      %v600 = vadd.f32 0.0, %v599
      %601 = vmatmul.f32.gmra.mxu0 %v535
      %v602 = vpop.f32.mrf.mxu0
      %v603 = vadd.f32 0.0, %v602
      %604 = vmatmul.f32.gmra.mxu0 %v538
      %v605 = vpop.f32.mrf.mxu0
      %v606 = vadd.f32 0.0, %v605
      %607 = vdwg.mxu0
      %v608 = vmul.f32 %v561, 1.442695
      %v609 = vpow.pop %v608
      %v610 = vmul.f32 %v564, 1.442695
      %v611 = vpow.pop %v610
      %v612 = vmul.f32 %v567, 1.442695
      %v613 = vpow.pop %v612
      %v614 = vmul.f32 %v570, 1.442695
      %v615 = vpow.pop %v614
      %v616 = vmul.f32 %v573, 1.442695
      %v617 = vpow.pop %v616
      %v618 = vmul.f32 %v576, 1.442695
      %v619 = vpow.pop %v618
      %v620 = vmul.f32 %v579, 1.442695
      %v621 = vpow.pop %v620
      %v622 = vmul.f32 %v582, 1.442695
      %v623 = vpow.pop %v622
      %v624 = vmul.f32 %v585, 1.442695
      %v625 = vpow.pop %v624
      %v626 = vmul.f32 %v588, 1.442695
      %v627 = vpow.pop %v626
      %v628 = vmul.f32 %v591, 1.442695
      %v629 = vpow.pop %v628
      %v630 = vmul.f32 %v594, 1.442695
      %v631 = vpow.pop %v630
      %v632 = vmul.f32 %v597, 1.442695
      %v633 = vpow.pop %v632
      %v634 = vmul.f32 %v600, 1.442695
      %v635 = vpow.pop %v634
      %v636 = vmul.f32 %v603, 1.442695
      %v637 = vpow.pop %v636
      %v638 = vmul.f32 %v606, 1.442695
      %v639 = vpow.pop %v638
      %v640 = vsel %vm153, %v411, 1.0
      %641 = vmatpush.msra.mxu0 %v639
      %642 = vmatpush.msra.mxu0 %v637
      %643 = vmatpush.msra.mxu0 %v635
      %644 = vmatpush.msra.mxu0 %v633
      %645 = vmatpush.msra.mxu0 %v631
      %646 = vmatpush.msra.mxu0 %v629
      %647 = vmatpush.msra.mxu0 %v627
      %648 = vmatpush.msra.mxu0 %v625
      %649 = vmatpush.msra.mxu0 %v623
      %650 = vmatpush.msra.mxu0 %v621
      %651 = vmatpush.msra.mxu0 %v619
      %652 = vmatpush.msra.mxu0 %v617
      %653 = vmatpush.msra.mxu0 %v615
      %654 = vmatpush.msra.mxu0 %v613
      %655 = vmatpush.msra.mxu0 %v611
      %656 = vmatpush.msra.mxu0 %v609
      %657 = vmatmul.f32.gmra.mxu0 %v640
      %v658 = vpop.f32.mrf.mxu0
      %v659 = vadd.f32 0.0, %v658
      %660 = vdwg.mxu0
      %v661 = vsub.f32 %v659, 41.088814
      %v662 = vrcp.pop %v661
      %v663 = vperm.slane %v662, 2
      %v664 = vmul.f32 %v659, %v663
      %s665 = scalar_lea.vmem %s145, 2
      %666 = vst [vmem:[%s665] sm:$0x3] %v664
      %s667 = scalar_lea.vmem %s139, 4
      %v668 = vld [vmem:[%s667] sm:$0x3]
      %v670 = vsel %vm153, %v668, 0
      %672 = vmatpush.msra.mxu0 0.0
      %673 = vmatpush.msra.mxu0 0.0
      %674 = vmatpush.msra.mxu0 0.0
      %675 = vmatpush.msra.mxu0 0.0
      %676 = vmatpush.msra.mxu0 0.0
      %677 = vmatpush.msra.mxu0 0.0
      %678 = vmatpush.msra.mxu0 0.0
      %679 = vmatpush.msra.mxu0 0.0
      %680 = vmatpush.msra.mxu0 0.0
      %681 = vmatpush.msra.mxu0 0.0
      %682 = vmatpush.msra.mxu0 0.0
      %683 = vmatpush.msra.mxu0 0.0
      %684 = vmatpush.msra.mxu0 0.0
      %685 = vmatpush.msra.mxu0 0.0
      %686 = vmatpush.msra.mxu0 0.0
      %687 = vmatpush.msra.mxu0 %v670
      %688 = vmatmul.f32.gmra.mxu0 %v151
      %v689 = vpop.f32.mrf.mxu0
      %v690 = vadd.f32 0.0, %v689
      %691 = vdwg.mxu0
      %v692 = vmul.f32 %v690, %v690
      %v693 = vsel %vm153, %v692, 0.0
      %v694 = vrot.slane %v693, 4
      %v695 = vadd.f32 %v693, %v694
      %v696 = vrot.slane %v695, 2
      %v697 = vadd.f32 %v695, %v696
      %v698 = vrot.slane %v697, 1
      %v699 = vadd.f32 %v697, %v698
      %v700 = vrsqrt.pop %v699
      %v701 = vmul.f32 %v700, %v699
      %v702 = vmul.f32 %v701, %v700
      %v703 = vmul.f32 0.5, %v702
      %v704 = vsub.f32 1.5, %v703
      %v705 = vmul.f32 %v700, %v704
      %v706 = vmul.f32 %v699, %v705
      %vm707 = vcmp.eq.f32.partialorder %v699, inf
      %v708 = vsel %vm707, %v699, %v706
      %vm709 = vcmp.eq.f32.partialorder %v699, 0.0
      %v710 = vand.u32 %v699, 2147483648
      %v711 = vsel %vm709, %v710, %v708
      %v712 = vadd.f32 %v711, 1e-08
      %v713 = vrcp.pop %v712
      %v714 = vmul.f32 %v690, %v713
      %v715 = vsel %vm153, %v714, 1.0
      %v716 = vmul.f32 %v715, 0.25
      %717 = vxpose.xlu0.b32.start [1/16] %v716, 128
      %718 = vxpose.xlu0.b32.cont [2/16] 0.0, 128
      %719 = vxpose.xlu0.b32.cont [3/16] 0.0, 128
      %720 = vxpose.xlu0.b32.cont [4/16] 0.0, 128
      %721 = vxpose.xlu0.b32.cont [5/16] 0.0, 128
      %722 = vxpose.xlu0.b32.cont [6/16] 0.0, 128
      %723 = vxpose.xlu0.b32.cont [7/16] 0.0, 128
      %724 = vxpose.xlu0.b32.cont [8/16] 0.0, 128
      %725 = vxpose.xlu0.b32.cont [9/16] 0.0, 128
      %726 = vxpose.xlu0.b32.cont [10/16] 0.0, 128
      %727 = vxpose.xlu0.b32.cont [11/16] 0.0, 128
      %728 = vxpose.xlu0.b32.cont [12/16] 0.0, 128
      %729 = vxpose.xlu0.b32.cont [13/16] 0.0, 128
      %730 = vxpose.xlu0.b32.cont [14/16] 0.0, 128
      %731 = vxpose.xlu0.b32.cont [15/16] 0.0, 128
      %732 = vxpose.xlu0.b32.end [16/16] 0.0, 128
      %v733 = vpop.trf.xlu0
      %v734 = vpop.trf.xlu0
      %v735 = vpop.trf.xlu0
      %v736 = vpop.trf.xlu0
      %v737 = vpop.trf.xlu0
      %v738 = vpop.trf.xlu0
      %v739 = vpop.trf.xlu0
      %v740 = vpop.trf.xlu0
      %v741 = vpop.trf.xlu0
      %v742 = vpop.trf.xlu0
      %v743 = vpop.trf.xlu0
      %v744 = vpop.trf.xlu0
      %v745 = vpop.trf.xlu0
      %v746 = vpop.trf.xlu0
      %v747 = vpop.trf.xlu0
      %v748 = vpop.trf.xlu0
      %v750 = vsel %vm234, %v733, 0
      %v753 = vsel %vm234, %v734, 0
      %v756 = vsel %vm234, %v735, 0
      %v759 = vsel %vm234, %v736, 0
      %v762 = vsel %vm234, %v737, 0
      %v765 = vsel %vm234, %v738, 0
      %v768 = vsel %vm234, %v739, 0
      %v771 = vsel %vm234, %v740, 0
      %v774 = vsel %vm234, %v741, 0
      %v777 = vsel %vm234, %v742, 0
      %v780 = vsel %vm234, %v743, 0
      %v783 = vsel %vm234, %v744, 0
      %v786 = vsel %vm234, %v745, 0
      %v789 = vsel %vm234, %v746, 0
      %v792 = vsel %vm234, %v747, 0
      %v795 = vsel %vm234, %v748, 0
      %v798 = vsel %vm283, %v715, 0
      %800 = vmatpush.msra.mxu0 0.0
      %801 = vmatpush.msra.mxu0 0.0
      %802 = vmatpush.msra.mxu0 0.0
      %803 = vmatpush.msra.mxu0 0.0
      %804 = vmatpush.msra.mxu0 0.0
      %805 = vmatpush.msra.mxu0 0.0
      %806 = vmatpush.msra.mxu0 0.0
      %807 = vmatpush.msra.mxu0 0.0
      %808 = vmatpush.msra.mxu0 0.0
      %809 = vmatpush.msra.mxu0 0.0
      %810 = vmatpush.msra.mxu0 0.0
      %811 = vmatpush.msra.mxu0 0.0
      %812 = vmatpush.msra.mxu0 0.0
      %813 = vmatpush.msra.mxu0 0.0
      %814 = vmatpush.msra.mxu0 0.0
      %815 = vmatpush.msra.mxu0 %v798
      %816 = vmatmul.f32.gmra.mxu0 %v750
      %v817 = vpop.f32.mrf.mxu0
      %v818 = vadd.f32 0.0, %v817
      %819 = vmatmul.f32.gmra.mxu0 %v753
      %v820 = vpop.f32.mrf.mxu0
      %v821 = vadd.f32 0.0, %v820
      %822 = vmatmul.f32.gmra.mxu0 %v756
      %v823 = vpop.f32.mrf.mxu0
      %v824 = vadd.f32 0.0, %v823
      %825 = vmatmul.f32.gmra.mxu0 %v759
      %v826 = vpop.f32.mrf.mxu0
      %v827 = vadd.f32 0.0, %v826
      %828 = vmatmul.f32.gmra.mxu0 %v762
      %v829 = vpop.f32.mrf.mxu0
      %v830 = vadd.f32 0.0, %v829
      %831 = vmatmul.f32.gmra.mxu0 %v765
      %v832 = vpop.f32.mrf.mxu0
      %v833 = vadd.f32 0.0, %v832
      %834 = vmatmul.f32.gmra.mxu0 %v768
      %v835 = vpop.f32.mrf.mxu0
      %v836 = vadd.f32 0.0, %v835
      %837 = vmatmul.f32.gmra.mxu0 %v771
      %v838 = vpop.f32.mrf.mxu0
      %v839 = vadd.f32 0.0, %v838
      %840 = vmatmul.f32.gmra.mxu0 %v774
      %v841 = vpop.f32.mrf.mxu0
      %v842 = vadd.f32 0.0, %v841
      %843 = vmatmul.f32.gmra.mxu0 %v777
      %v844 = vpop.f32.mrf.mxu0
      %v845 = vadd.f32 0.0, %v844
      %846 = vmatmul.f32.gmra.mxu0 %v780
      %v847 = vpop.f32.mrf.mxu0
      %v848 = vadd.f32 0.0, %v847
      %849 = vmatmul.f32.gmra.mxu0 %v783
      %v850 = vpop.f32.mrf.mxu0
      %v851 = vadd.f32 0.0, %v850
      %852 = vmatmul.f32.gmra.mxu0 %v786
      %v853 = vpop.f32.mrf.mxu0
      %v854 = vadd.f32 0.0, %v853
      %855 = vmatmul.f32.gmra.mxu0 %v789
      %v856 = vpop.f32.mrf.mxu0
      %v857 = vadd.f32 0.0, %v856
      %858 = vmatmul.f32.gmra.mxu0 %v792
      %v859 = vpop.f32.mrf.mxu0
      %v860 = vadd.f32 0.0, %v859
      %861 = vmatmul.f32.gmra.mxu0 %v795
      %v862 = vpop.f32.mrf.mxu0
      %v863 = vadd.f32 0.0, %v862
      %864 = vdwg.mxu0
      %v865 = vmul.f32 %v818, 1.442695
      %v866 = vpow.pop %v865
      %v867 = vmul.f32 %v821, 1.442695
      %v868 = vpow.pop %v867
      %v869 = vmul.f32 %v824, 1.442695
      %v870 = vpow.pop %v869
      %v871 = vmul.f32 %v827, 1.442695
      %v872 = vpow.pop %v871
      %v873 = vmul.f32 %v830, 1.442695
      %v874 = vpow.pop %v873
      %v875 = vmul.f32 %v833, 1.442695
      %v876 = vpow.pop %v875
      %v877 = vmul.f32 %v836, 1.442695
      %v878 = vpow.pop %v877
      %v879 = vmul.f32 %v839, 1.442695
      %v880 = vpow.pop %v879
      %v881 = vmul.f32 %v842, 1.442695
      %v882 = vpow.pop %v881
      %v883 = vmul.f32 %v845, 1.442695
      %v884 = vpow.pop %v883
      %v885 = vmul.f32 %v848, 1.442695
      %v886 = vpow.pop %v885
      %v887 = vmul.f32 %v851, 1.442695
      %v888 = vpow.pop %v887
      %v889 = vmul.f32 %v854, 1.442695
      %v890 = vpow.pop %v889
      %v891 = vmul.f32 %v857, 1.442695
      %v892 = vpow.pop %v891
      %v893 = vmul.f32 %v860, 1.442695
      %v894 = vpow.pop %v893
      %v895 = vmul.f32 %v863, 1.442695
      %v896 = vpow.pop %v895
      %v897 = vsel %vm153, %v668, 1.0
      %898 = vmatpush.msra.mxu0 %v896
      %899 = vmatpush.msra.mxu0 %v894
      %900 = vmatpush.msra.mxu0 %v892
      %901 = vmatpush.msra.mxu0 %v890
      %902 = vmatpush.msra.mxu0 %v888
      %903 = vmatpush.msra.mxu0 %v886
      %904 = vmatpush.msra.mxu0 %v884
      %905 = vmatpush.msra.mxu0 %v882
      %906 = vmatpush.msra.mxu0 %v880
      %907 = vmatpush.msra.mxu0 %v878
      %908 = vmatpush.msra.mxu0 %v876
      %909 = vmatpush.msra.mxu0 %v874
      %910 = vmatpush.msra.mxu0 %v872
      %911 = vmatpush.msra.mxu0 %v870
      %912 = vmatpush.msra.mxu0 %v868
      %913 = vmatpush.msra.mxu0 %v866
      %914 = vmatmul.f32.gmra.mxu0 %v897
      %v915 = vpop.f32.mrf.mxu0
      %v916 = vadd.f32 0.0, %v915
      %917 = vdwg.mxu0
      %v918 = vsub.f32 %v916, 41.088814
      %v919 = vrcp.pop %v918
      %v920 = vperm.slane %v919, 2
      %v921 = vmul.f32 %v916, %v920
      %s922 = scalar_lea.vmem %s145, 4
      %923 = vst [vmem:[%s922] sm:$0x3] %v921
      %s924 = scalar_lea.vmem %s139, 6
      %v925 = vld [vmem:[%s924] sm:$0x3]
      %v927 = vsel %vm153, %v925, 0
      %929 = vmatpush.msra.mxu0 0.0
      %930 = vmatpush.msra.mxu0 0.0
      %931 = vmatpush.msra.mxu0 0.0
      %932 = vmatpush.msra.mxu0 0.0
      %933 = vmatpush.msra.mxu0 0.0
      %934 = vmatpush.msra.mxu0 0.0
      %935 = vmatpush.msra.mxu0 0.0
      %936 = vmatpush.msra.mxu0 0.0
      %937 = vmatpush.msra.mxu0 0.0
      %938 = vmatpush.msra.mxu0 0.0
      %939 = vmatpush.msra.mxu0 0.0
      %940 = vmatpush.msra.mxu0 0.0
      %941 = vmatpush.msra.mxu0 0.0
      %942 = vmatpush.msra.mxu0 0.0
      %943 = vmatpush.msra.mxu0 0.0
      %944 = vmatpush.msra.mxu0 %v927
      %945 = vmatmul.f32.gmra.mxu0 %v151
      %v946 = vpop.f32.mrf.mxu0
      %v947 = vadd.f32 0.0, %v946
      %948 = vdwg.mxu0
      %v949 = vmul.f32 %v947, %v947
      %v950 = vsel %vm153, %v949, 0.0
      %v951 = vrot.slane %v950, 4
      %v952 = vadd.f32 %v950, %v951
      %v953 = vrot.slane %v952, 2
      %v954 = vadd.f32 %v952, %v953
      %v955 = vrot.slane %v954, 1
      %v956 = vadd.f32 %v954, %v955
      %v957 = vrsqrt.pop %v956
      %v958 = vmul.f32 %v957, %v956
      %v959 = vmul.f32 %v958, %v957
      %v960 = vmul.f32 0.5, %v959
      %v961 = vsub.f32 1.5, %v960
      %v962 = vmul.f32 %v957, %v961
      %v963 = vmul.f32 %v956, %v962
      %vm964 = vcmp.eq.f32.partialorder %v956, inf
      %v965 = vsel %vm964, %v956, %v963
      %vm966 = vcmp.eq.f32.partialorder %v956, 0.0
      %v967 = vand.u32 %v956, 2147483648
      %v968 = vsel %vm966, %v967, %v965
      %v969 = vadd.f32 %v968, 1e-08
      %v970 = vrcp.pop %v969
      %v971 = vmul.f32 %v947, %v970
      %v972 = vsel %vm153, %v971, 1.0
      %v973 = vmul.f32 %v972, 0.25
      %974 = vxpose.xlu0.b32.start [1/16] %v973, 128
      %975 = vxpose.xlu0.b32.cont [2/16] 0.0, 128
      %976 = vxpose.xlu0.b32.cont [3/16] 0.0, 128
      %977 = vxpose.xlu0.b32.cont [4/16] 0.0, 128
      %978 = vxpose.xlu0.b32.cont [5/16] 0.0, 128
      %979 = vxpose.xlu0.b32.cont [6/16] 0.0, 128
      %980 = vxpose.xlu0.b32.cont [7/16] 0.0, 128
      %981 = vxpose.xlu0.b32.cont [8/16] 0.0, 128
      %982 = vxpose.xlu0.b32.cont [9/16] 0.0, 128
      %983 = vxpose.xlu0.b32.cont [10/16] 0.0, 128
      %984 = vxpose.xlu0.b32.cont [11/16] 0.0, 128
      %985 = vxpose.xlu0.b32.cont [12/16] 0.0, 128
      %986 = vxpose.xlu0.b32.cont [13/16] 0.0, 128
      %987 = vxpose.xlu0.b32.cont [14/16] 0.0, 128
      %988 = vxpose.xlu0.b32.cont [15/16] 0.0, 128
      %989 = vxpose.xlu0.b32.end [16/16] 0.0, 128
      %v990 = vpop.trf.xlu0
      %v991 = vpop.trf.xlu0
      %v992 = vpop.trf.xlu0
      %v993 = vpop.trf.xlu0
      %v994 = vpop.trf.xlu0
      %v995 = vpop.trf.xlu0
      %v996 = vpop.trf.xlu0
      %v997 = vpop.trf.xlu0
      %v998 = vpop.trf.xlu0
      %v999 = vpop.trf.xlu0
      %v1000 = vpop.trf.xlu0
      %v1001 = vpop.trf.xlu0
      %v1002 = vpop.trf.xlu0
      %v1003 = vpop.trf.xlu0
      %v1004 = vpop.trf.xlu0
      %v1005 = vpop.trf.xlu0
      %v1007 = vsel %vm234, %v990, 0
      %v1010 = vsel %vm234, %v991, 0
      %v1013 = vsel %vm234, %v992, 0
      %v1016 = vsel %vm234, %v993, 0
      %v1019 = vsel %vm234, %v994, 0
      %v1022 = vsel %vm234, %v995, 0
      %v1025 = vsel %vm234, %v996, 0
      %v1028 = vsel %vm234, %v997, 0
      %v1031 = vsel %vm234, %v998, 0
      %v1034 = vsel %vm234, %v999, 0
      %v1037 = vsel %vm234, %v1000, 0
      %v1040 = vsel %vm234, %v1001, 0
      %v1043 = vsel %vm234, %v1002, 0
      %v1046 = vsel %vm234, %v1003, 0
      %v1049 = vsel %vm234, %v1004, 0
      %v1052 = vsel %vm234, %v1005, 0
      %v1055 = vsel %vm283, %v972, 0
      %1057 = vmatpush.msra.mxu0 0.0
      %1058 = vmatpush.msra.mxu0 0.0
      %1059 = vmatpush.msra.mxu0 0.0
      %1060 = vmatpush.msra.mxu0 0.0
      %1061 = vmatpush.msra.mxu0 0.0
      %1062 = vmatpush.msra.mxu0 0.0
      %1063 = vmatpush.msra.mxu0 0.0
      %1064 = vmatpush.msra.mxu0 0.0
      %1065 = vmatpush.msra.mxu0 0.0
      %1066 = vmatpush.msra.mxu0 0.0
      %1067 = vmatpush.msra.mxu0 0.0
      %1068 = vmatpush.msra.mxu0 0.0
      %1069 = vmatpush.msra.mxu0 0.0
      %1070 = vmatpush.msra.mxu0 0.0
      %1071 = vmatpush.msra.mxu0 0.0
      %1072 = vmatpush.msra.mxu0 %v1055
      %1073 = vmatmul.f32.gmra.mxu0 %v1007
      %v1074 = vpop.f32.mrf.mxu0
      %v1075 = vadd.f32 0.0, %v1074
      %1076 = vmatmul.f32.gmra.mxu0 %v1010
      %v1077 = vpop.f32.mrf.mxu0
      %v1078 = vadd.f32 0.0, %v1077
      %1079 = vmatmul.f32.gmra.mxu0 %v1013
      %v1080 = vpop.f32.mrf.mxu0
      %v1081 = vadd.f32 0.0, %v1080
      %1082 = vmatmul.f32.gmra.mxu0 %v1016
      %v1083 = vpop.f32.mrf.mxu0
      %v1084 = vadd.f32 0.0, %v1083
      %1085 = vmatmul.f32.gmra.mxu0 %v1019
      %v1086 = vpop.f32.mrf.mxu0
      %v1087 = vadd.f32 0.0, %v1086
      %1088 = vmatmul.f32.gmra.mxu0 %v1022
      %v1089 = vpop.f32.mrf.mxu0
      %v1090 = vadd.f32 0.0, %v1089
      %1091 = vmatmul.f32.gmra.mxu0 %v1025
      %v1092 = vpop.f32.mrf.mxu0
      %v1093 = vadd.f32 0.0, %v1092
      %1094 = vmatmul.f32.gmra.mxu0 %v1028
      %v1095 = vpop.f32.mrf.mxu0
      %v1096 = vadd.f32 0.0, %v1095
      %1097 = vmatmul.f32.gmra.mxu0 %v1031
      %v1098 = vpop.f32.mrf.mxu0
      %v1099 = vadd.f32 0.0, %v1098
      %1100 = vmatmul.f32.gmra.mxu0 %v1034
      %v1101 = vpop.f32.mrf.mxu0
      %v1102 = vadd.f32 0.0, %v1101
      %1103 = vmatmul.f32.gmra.mxu0 %v1037
      %v1104 = vpop.f32.mrf.mxu0
      %v1105 = vadd.f32 0.0, %v1104
      %1106 = vmatmul.f32.gmra.mxu0 %v1040
      %v1107 = vpop.f32.mrf.mxu0
      %v1108 = vadd.f32 0.0, %v1107
      %1109 = vmatmul.f32.gmra.mxu0 %v1043
      %v1110 = vpop.f32.mrf.mxu0
      %v1111 = vadd.f32 0.0, %v1110
      %1112 = vmatmul.f32.gmra.mxu0 %v1046
      %v1113 = vpop.f32.mrf.mxu0
      %v1114 = vadd.f32 0.0, %v1113
      %1115 = vmatmul.f32.gmra.mxu0 %v1049
      %v1116 = vpop.f32.mrf.mxu0
      %v1117 = vadd.f32 0.0, %v1116
      %1118 = vmatmul.f32.gmra.mxu0 %v1052
      %v1119 = vpop.f32.mrf.mxu0
      %v1120 = vadd.f32 0.0, %v1119
      %1121 = vdwg.mxu0
      %v1122 = vmul.f32 %v1075, 1.442695
      %v1123 = vpow.pop %v1122
      %v1124 = vmul.f32 %v1078, 1.442695
      %v1125 = vpow.pop %v1124
      %v1126 = vmul.f32 %v1081, 1.442695
      %v1127 = vpow.pop %v1126
      %v1128 = vmul.f32 %v1084, 1.442695
      %v1129 = vpow.pop %v1128
      %v1130 = vmul.f32 %v1087, 1.442695
      %v1131 = vpow.pop %v1130
      %v1132 = vmul.f32 %v1090, 1.442695
      %v1133 = vpow.pop %v1132
      %v1134 = vmul.f32 %v1093, 1.442695
      %v1135 = vpow.pop %v1134
      %v1136 = vmul.f32 %v1096, 1.442695
      %v1137 = vpow.pop %v1136
      %v1138 = vmul.f32 %v1099, 1.442695
      %v1139 = vpow.pop %v1138
      %v1140 = vmul.f32 %v1102, 1.442695
      %v1141 = vpow.pop %v1140
      %v1142 = vmul.f32 %v1105, 1.442695
      %v1143 = vpow.pop %v1142
      %v1144 = vmul.f32 %v1108, 1.442695
      %v1145 = vpow.pop %v1144
      %v1146 = vmul.f32 %v1111, 1.442695
      %v1147 = vpow.pop %v1146
      %v1148 = vmul.f32 %v1114, 1.442695
      %v1149 = vpow.pop %v1148
      %v1150 = vmul.f32 %v1117, 1.442695
      %v1151 = vpow.pop %v1150
      %v1152 = vmul.f32 %v1120, 1.442695
      %v1153 = vpow.pop %v1152
      %v1154 = vsel %vm153, %v925, 1.0
      %1155 = vmatpush.msra.mxu0 %v1153
      %1156 = vmatpush.msra.mxu0 %v1151
      %1157 = vmatpush.msra.mxu0 %v1149
      %1158 = vmatpush.msra.mxu0 %v1147
      %1159 = vmatpush.msra.mxu0 %v1145
      %1160 = vmatpush.msra.mxu0 %v1143
      %1161 = vmatpush.msra.mxu0 %v1141
      %1162 = vmatpush.msra.mxu0 %v1139
      %1163 = vmatpush.msra.mxu0 %v1137
      %1164 = vmatpush.msra.mxu0 %v1135
      %1165 = vmatpush.msra.mxu0 %v1133
      %1166 = vmatpush.msra.mxu0 %v1131
      %1167 = vmatpush.msra.mxu0 %v1129
      %1168 = vmatpush.msra.mxu0 %v1127
      %1169 = vmatpush.msra.mxu0 %v1125
      %1170 = vmatpush.msra.mxu0 %v1123
      %1171 = vmatmul.f32.gmra.mxu0 %v1154
      %v1172 = vpop.f32.mrf.mxu0
      %v1173 = vadd.f32 0.0, %v1172
      %1174 = vdwg.mxu0
      %v1175 = vsub.f32 %v1173, 41.088814
      %v1176 = vrcp.pop %v1175
      %v1177 = vperm.slane %v1176, 2
      %v1178 = vmul.f32 %v1173, %v1177
      %s1179 = scalar_lea.vmem %s145, 6
      %1180 = vst [vmem:[%s1179] sm:$0x3] %v1178
      %s1181 = smul.u32 4, %s13
      %p1182 = scmp.lt.s32.totalorder %s1181, 7
      %s1183 = scalar_select %p1182, %s1181, 7
      %s1184 = smul.addr %s1183, 2
      %s1185 = scalar_lea.vmem %s2, %s1184
      // Predicated region
      $region29: #{forward.3} parent=27 // pred_check
        %p1186 = pneg %p78
      $region30: #{forward.3} parent=27 // pred_check_branch
        %1188 = sbr.rel (%p1186) target = $region32
      $region31: #{forward.3} parent=27 // pred_region
        %s1189 = smul.u32 4, %s13
      $region32: #{forward.3} parent=27 // pred_fallthru
        _
    $region28: #{forward.3} parent=5 // pred_fallthru
      _
    %p1190 = scmp.le.s32.totalorder 2, %s8
    // Predicated region
    $region33: #{forward.3} parent=5 // pred_check
      %p1191 = pneg %p1190
    $region34: #{forward.3} parent=5 // pred_check_branch
      %1193 = sbr.rel (%p1191) target = $region36
    $region35: #{forward.3} parent=5 // pred_region
      %s1194 = ssub.s32 %s8, 2
      // Predicated region
      $region37: #{forward.3} parent=35 // pred_check
        %p1195 = pneg %p84
      $region38: #{forward.3} parent=35 // pred_check_branch
        %1197 = sbr.rel (%p1195) target = $region40
      $region39: #{forward.3} parent=35 // pred_region
        %s1198 = smul.u32 4, %s14
        %p1199 = scmp.lt.s32.totalorder %s1198, 7
        %s1200 = scalar_select %p1199, %s1198, 7
        %s1201 = smul.addr %s1200, 2
        %s1202 = scalar_lea.vmem %s2, %s1201
      $region40: #{forward.3} parent=35 // pred_fallthru
        _
    $region36: #{forward.3} parent=5 // pred_fallthru
      _
  $region6: #{forward.3} parent=0 // loop_footer
    %s12 = sadd.s32 1, %s8
  $region7: #{forward.3} parent=0 // loop_footer_branch
    %7 = sbr.rel target = $region3
  $region8: #{forward.3} parent=0 // loop_exit
    _

</llo_original>
